<compile_context>
chip_gen: v7x
topology: tpu7x:2x2x1
jax: 0.10.0
libtpu: 0.0.40
codegen_flags: <defaults>
</compile_context>

<pallas_src>
import functools

import jax
import jax.numpy as jnp
from jax.experimental import pallas as pl
from jax.experimental.pallas import tpu as pltpu


# ---------------------------------------------------------------------------
# Kernel 1: encoder stand-in + AdaptiveConcatPool2d, grid over HW tiles only.
# ---------------------------------------------------------------------------
def enc_pool_kernel(x_ref, w_ref, b_ref, o_ref, sum_sc, max_sc, *,
                    inv_hw, n_inst, bc, chunk):
    # x_ref:  (BN, C, TILE)   native-dtype image slab, HW minor (lane-dense DMA)
    # w_ref:  (NC, C)  pointwise-conv weight;  b_ref: (NC, 1) bias
    # o_ref:  (NCHUNK, n_inst*bc, 2*NC)  time-major features, [max | avg] lanes
    # sum_sc / max_sc: (NC, BN) running per-image column accumulators
    h_idx = pl.program_id(0)
    bn, c_in, tile = x_ref.shape
    nc = w_ref.shape[0]

    @pl.when(h_idx == 0)
    def _init():
        sum_sc[...] = jnp.zeros_like(sum_sc)
        # ReLU output is >= 0, so 0 is a correct identity for the running max.
        max_sc[...] = jnp.zeros_like(max_sc)

    w = w_ref[...]                                  # (NC, C)  hoisted
    b = b_ref[...]                                  # (NC, 1)

    n_chunks = tile // chunk
    for r in range(bn):                             # static unroll over images
        sum_col = jnp.zeros((nc, 1), jnp.float32)   # register accumulators
        max_col = jnp.zeros((nc, 1), jnp.float32)
        for k in range(n_chunks):                   # bounded-vreg compute chunks
            xc = x_ref[r, :, k * chunk:(k + 1) * chunk].astype(jnp.float32)
            # Pointwise conv as C (tiny, static) VPU FMAs over lane-dense HW.
            y = w[:, 0:1] * xc[0:1, :]
            for ci in range(1, c_in):
                y = y + w[:, ci:ci + 1] * xc[ci:ci + 1, :]
            y = jnp.maximum(y + b, 0.0)             # (NC, chunk) conv + ReLU
            sum_col = sum_col + jnp.sum(y, axis=1, keepdims=True)
            max_col = jnp.maximum(max_col, jnp.max(y, axis=1, keepdims=True))
        # One small RMW per image per grid step into the cross-step scratch.
        sum_sc[:, r:r + 1] = sum_sc[:, r:r + 1] + sum_col
        max_sc[:, r:r + 1] = jnp.maximum(max_sc[:, r:r + 1], max_col)

    @pl.when(h_idx == pl.num_programs(0) - 1)
    def _finalize():
        # (NC,1) column -> (1,NC) lane row via eye-mask + sublane reduce
        # (robust relayout; at production nc this becomes a single 2-D transpose).
        eye = (jax.lax.broadcasted_iota(jnp.int32, (nc, nc), 0) ==
               jax.lax.broadcasted_iota(jnp.int32, (nc, nc), 1)).astype(
                   jnp.float32)
        for r in range(bn):                         # input row r = b*n_inst + t
            b_img = r // n_inst
            t_img = r % n_inst
            cidx = b_img // bc                      # LSTM batch chunk
            row = t_img * bc + (b_img % bc)         # time-major row in chunk
            mx = jnp.sum(max_sc[:, r:r + 1] * eye, axis=0, keepdims=True)
            sm = jnp.sum(sum_sc[:, r:r + 1] * eye, axis=0,
                         keepdims=True) * inv_hw
            o_ref[cidx, row:row + 1, 0:nc] = mx          # fastai order: max
            o_ref[cidx, row:row + 1, nc:2 * nc] = sm     # then avg


def _pick_hw_tile(hw, max_tile, bytes_per_lane, budget=4 << 20):
    """Largest power-of-two 128-multiple dividing hw within the VMEM budget."""
    best = 0
    cand = 128
    while cand <= min(max_tile, hw):
        if hw % cand == 0 and cand * bytes_per_lane <= budget:
            best = cand
        cand *= 2
    return best if best > 0 else hw     # full extent is always legal


def _pick_chunk(tile):
    for c in (512, 256, 128):
        if tile % c == 0:
            return c
    return tile


def enc_pool(x, w, b, *, bs, n_inst, n_batch_chunks=1, max_hw_tile=2048):
    """x: (B*N, C, HW) native dtype -> (n_chunks, N*Bc, 2*NC) time-major f32."""
    bn, c, hw = x.shape
    nc = w.shape[0]
    assert bn == bs * n_inst and bs % n_batch_chunks == 0
    bc = bs // n_batch_chunks
    bytes_per_lane = bn * c * jnp.dtype(x.dtype).itemsize
    tile = _pick_hw_tile(hw, max_hw_tile, bytes_per_lane)
    chunk = _pick_chunk(tile)
    kernel = functools.partial(enc_pool_kernel, inv_hw=1.0 / hw,
                               n_inst=n_inst, bc=bc, chunk=chunk)
    return pl.pallas_call(
        kernel,
        out_shape=jax.ShapeDtypeStruct(
            (n_batch_chunks, n_inst * bc, 2 * nc), jnp.float32),
        grid_spec=pltpu.PrefetchScalarGridSpec(
            num_scalar_prefetch=0,
            grid=(hw // tile,),
            in_specs=[
                pl.BlockSpec((bn, c, tile), lambda h: (0, 0, h)),
                pl.BlockSpec((nc, c), lambda h: (0, 0)),
                pl.BlockSpec((nc, 1), lambda h: (0, 0)),
            ],
            out_specs=pl.BlockSpec(
                (n_batch_chunks, n_inst * bc, 2 * nc), lambda h: (0, 0, 0)),
            scratch_shapes=[
                pltpu.VMEM((nc, bn), jnp.float32),   # running sum per image
                pltpu.VMEM((nc, bn), jnp.float32),   # running max per image
            ],
        ),
        compiler_params=pltpu.CompilerParams(
            dimension_semantics=("arbitrary",),
            vmem_limit_bytes=32 * 1024 * 1024,
        ),
    )(x, w, b)


# ---------------------------------------------------------------------------
# Kernel 2: fused 2-layer bidirectional LSTM + final Linear (single call,
#           optional 'parallel' grid over batch chunks for v7x dual-TC).
# ---------------------------------------------------------------------------
def lstm_fc_kernel(x_ref, wih1_ref, whh1_ref, b1_ref,
                   wih2_ref, whh2_ref, b2_ref,
                   wfc_ref, bfc_ref, out_ref,
                   xg_sc, seq1_sc, seq2_sc, *, n_inst):
    # x_ref:   (1, T*Bc, D)   time-major features for this batch chunk
    # wih*:    (Din, 8H) = [wih_fwd | wih_bwd];  whh*: (H, 8H);  b*: (1, 8H)
    # wfc_ref: (T, 2H, K); bfc_ref: (1, K); out_ref: (Bc, K)
    # scratch: xg_sc (T*Bc, 8H), seq1/2_sc (T*Bc, 2H)
    T = n_inst
    H = whh1_ref.shape[0]
    K = out_ref.shape[1]
    bc = out_ref.shape[0]

    # Gate-lane mask, hoisted: lanes [2H,3H) are the "g" gate (tanh).
    lane = jax.lax.broadcasted_iota(jnp.int32, (bc, 4 * H), 1)
    g_mask = (lane >= 2 * H) & (lane < 3 * H)

    def cell(gates, c_prev):
        # One transcendental per element: sigmoid(x) = 0.5*(tanh(x/2) + 1).
        th = jnp.tanh(jnp.where(g_mask, gates, 0.5 * gates))
        act = jnp.where(g_mask, th, 0.5 * (th + 1.0))
        i_g = act[:, 0:H]
        f_g = act[:, H:2 * H]
        g_g = act[:, 2 * H:3 * H]
        o_g = act[:, 3 * H:4 * H]
        c = f_g * c_prev + i_g * g_g
        h = o_g * jnp.tanh(c)
        return h, c

    def run_layer(whh, out_sc):
        whh_f = whh[:, 0:4 * H]
        whh_b = whh[:, 4 * H:8 * H]
        # h/c live in registers across the (static) unrolled time loop.
        h_f = jnp.zeros((bc, H), jnp.float32)
        c_f = jnp.zeros((bc, H), jnp.float32)
        h_b = jnp.zeros((bc, H), jnp.float32)
        c_b = jnp.zeros((bc, H), jnp.float32)
        for t in range(T):                      # T = n_instance, small & fixed
            tb = T - 1 - t
            xg_f = xg_sc[t * bc:(t + 1) * bc, 0:4 * H]
            xg_b = xg_sc[tb * bc:(tb + 1) * bc, 4 * H:8 * H]
            h_f, c_f = cell(
                xg_f + jnp.dot(h_f, whh_f, preferred_element_type=jnp.float32),
                c_f)
            h_b, c_b = cell(
                xg_b + jnp.dot(h_b, whh_b, preferred_element_type=jnp.float32),
                c_b)
            out_sc[t * bc:(t + 1) * bc, 0:H] = h_f
            out_sc[tb * bc:(tb + 1) * bc, H:2 * H] = h_b

    # ---- layer 1: both directions / all timesteps in ONE input-gate matmul --
    xg_sc[...] = (jnp.dot(x_ref[0], wih1_ref[...],
                          preferred_element_type=jnp.float32) + b1_ref[...])
    run_layer(whh1_ref[...], seq1_sc)

    # ---- layer 2: input gates from layer-1 output (in VMEM), ONE matmul -----
    xg_sc[...] = (jnp.dot(seq1_sc[...], wih2_ref[...],
                          preferred_element_type=jnp.float32) + b2_ref[...])
    run_layer(whh2_ref[...], seq2_sc)

    # ---- final Linear fused in (fc over the batch-first flattened output) ---
    acc = jnp.zeros((bc, K), jnp.float32)
    for t in range(T):
        acc = acc + jnp.dot(seq2_sc[t * bc:(t + 1) * bc, :], wfc_ref[t],
                            preferred_element_type=jnp.float32)
    out_ref[...] = acc + bfc_ref[...]


def lstm_fc(feats, params, *, n_inst):
    n_chunks, rows, d = feats.shape
    bc = rows // n_inst
    bs = bc * n_chunks
    hidden = params["whh1"].shape[0]
    k = params["fc_b"].shape[1]
    kernel = functools.partial(lstm_fc_kernel, n_inst=n_inst)
    return pl.pallas_call(
        kernel,
        out_shape=jax.ShapeDtypeStruct((bs, k), jnp.float32),
        grid_spec=pltpu.PrefetchScalarGridSpec(
            num_scalar_prefetch=0,
            grid=(n_chunks,),
            in_specs=[
                pl.BlockSpec((1, rows, d), lambda c: (c, 0, 0)),
                pl.BlockSpec(params["wih1"].shape, lambda c: (0, 0)),
                pl.BlockSpec(params["whh1"].shape, lambda c: (0, 0)),
                pl.BlockSpec(params["b1"].shape, lambda c: (0, 0)),
                pl.BlockSpec(params["wih2"].shape, lambda c: (0, 0)),
                pl.BlockSpec(params["whh2"].shape, lambda c: (0, 0)),
                pl.BlockSpec(params["b2"].shape, lambda c: (0, 0)),
                pl.BlockSpec(params["fc_w"].shape, lambda c: (0, 0, 0)),
                pl.BlockSpec(params["fc_b"].shape, lambda c: (0, 0)),
            ],
            out_specs=pl.BlockSpec((bc, k), lambda c: (c, 0)),
            scratch_shapes=[
                pltpu.VMEM((rows, 8 * hidden), jnp.float32),   # input gates
                pltpu.VMEM((rows, 2 * hidden), jnp.float32),   # layer-1 output
                pltpu.VMEM((rows, 2 * hidden), jnp.float32),   # layer-2 output
            ],
        ),
        compiler_params=pltpu.CompilerParams(
            dimension_semantics=("parallel",),
        ),
    )(feats, params["wih1"], params["whh1"], params["b1"],
      params["wih2"], params["whh2"], params["b2"],
      params["fc_w"], params["fc_b"])


# ---------------------------------------------------------------------------
# Parameters (random; generated directly in the fused-direction layout).
# ---------------------------------------------------------------------------
def init_params(key, *, ch, nc, hidden, n_instance, num_classes):
    ks = iter(jax.random.split(key, 12))
    s = 0.1

    def rnd(shape):
        return (s * jax.random.normal(next(ks), shape)).astype(jnp.float32)

    return {
        "enc_w": rnd((nc, ch)),            # pointwise conv weight (NC, C)
        "enc_b": rnd((nc, 1)),
        # LSTM, fused directions: columns = [fwd i,f,g,o | bwd i,f,g,o];
        # bias = (b_ih + b_hh) per direction, concatenated.
        # wih1 rows 0:nc act on the max-pool half, rows nc:2nc on the avg half.
        "wih1": rnd((2 * nc, 8 * hidden)),
        "whh1": rnd((hidden, 8 * hidden)),
        "b1": rnd((1, 8 * hidden)),
        "wih2": rnd((2 * hidden, 8 * hidden)),
        "whh2": rnd((hidden, 8 * hidden)),
        "b2": rnd((1, 8 * hidden)),
        # fc weight pre-shaped (n, 2H, K) == reshape of (n*2H, K)
        "fc_w": rnd((n_instance, 2 * hidden, num_classes)),
        "fc_b": rnd((1, num_classes)),
    }


# ---------------------------------------------------------------------------
# Model wrapper (glue: one contiguous reshape only — no transpose, no cast).
# ---------------------------------------------------------------------------
def rsna_lstm_forward(inputs, params, *, max_hw_tile=2048, lstm_batch_chunks=1):
    """inputs: list of arrays shaped (bs, n, ch, w, h) (NCHW per instance)."""
    # fc.in_features == 2*hidden*n_instance, so the input list holds exactly
    # one tensor; the torch.cat over the list is the identity here.
    assert len(inputs) == 1
    x = inputs[0]
    bs, n, ch, w, h = x.shape
    # Contiguous reshape only (HW stays minor); dtype is upcast inside kernel 1.
    xi = x.reshape(bs * n, ch, w * h)
    feats = enc_pool(xi, params["enc_w"], params["enc_b"], bs=bs, n_inst=n,
                     n_batch_chunks=lstm_batch_chunks,
                     max_hw_tile=max_hw_tile)        # (chunks, n*bc, 2*nc)
    return lstm_fc(feats, params, n_inst=n)          # (bs, num_classes)


if __name__ == "__main__":
    # Small, forward-consistent shapes.
    bs, n_instance, ch, spatial = 2, 4, 3, 16
    nc, hidden, num_classes = 32, 32, 4

    key = jax.random.PRNGKey(0)
    k_x, k_p = jax.random.split(key)
    x = jax.random.normal(k_x, (bs, n_instance, ch, spatial, spatial),
                          dtype=jnp.float32)
    params = init_params(k_p, ch=ch, nc=nc, hidden=hidden,
                         n_instance=n_instance, num_classes=num_classes)

    # max_hw_tile=128 so the toy run (HW=256) exercises the multi-step
    # running-sum / running-max accumulation path across the HW grid axis.
    logits = rsna_lstm_forward([x], params, max_hw_tile=128)
    logits = jax.block_until_ready(logits)
    assert logits.shape == (bs, num_classes)
    print("KERNEL_OK")
</pallas_src>

<mosaic_0001>
module attributes {stable_mosaic.version = 11 : i64} {
  func.func @enc_pool_kernel(%arg0: i32, %arg1: memref<8x3x128xf32, #tpu.memory_space<vmem>>, %arg2: memref<32x3xf32, #tpu.memory_space<vmem>>, %arg3: memref<32x1xf32, #tpu.memory_space<vmem>>, %arg4: memref<1x8x64xf32, #tpu.memory_space<vmem>>, %arg5: memref<32x8xf32, #tpu.memory_space<vmem>>, %arg6: memref<32x8xf32, #tpu.memory_space<vmem>>) attributes {dimension_semantics = [#tpu.dimension_semantics<arbitrary>], iteration_bounds = array<i64: 2>, scalar_prefetch = 0 : i64, scratch_operands = 2 : i64, tpu.core_type = #tpu.core_type<tc>, window_params = [{transform_indices = @transform_0, window_bounds = array<i64: 8, 3, 128>}, {pipeline_mode = #tpu.pipeline_mode<synchronous>, transform_indices = @transform_1, window_bounds = array<i64: 32, 3>}, {pipeline_mode = #tpu.pipeline_mode<synchronous>, transform_indices = @transform_2, window_bounds = array<i64: 32, 1>}, {pipeline_mode = #tpu.pipeline_mode<synchronous>, transform_indices = @transform_3, window_bounds = array<i64: 1, 8, 64>}]} {
    %c0_i32 = arith.constant 0 : i32
    %0 = arith.cmpi eq, %arg0, %c0_i32 : i32
    %1 = arith.extui %0 : i1 to i32
    %c0_i32_0 = arith.constant 0 : i32
    %2 = arith.cmpi ne, %1, %c0_i32_0 : i32
    scf.if %2 {
      %cst_125 = arith.constant 0.000000e+00 : f32
      %304 = vector.broadcast %cst_125 : f32 to vector<32x8xf32>
      %c0_126 = arith.constant 0 : index
      %c0_127 = arith.constant 0 : index
      %305 = vector.load %arg5[%c0_126, %c0_127] : memref<32x8xf32, #tpu.memory_space<vmem>>, vector<32x8xf32>
      tpu.vector_store %arg5[%c0_126, %c0_127], %304 {strides = array<i32>} : memref<32x8xf32, #tpu.memory_space<vmem>>, vector<32x8xf32>,
      %cst_128 = arith.constant 0.000000e+00 : f32
      %306 = vector.broadcast %cst_128 : f32 to vector<32x8xf32>
      %c0_129 = arith.constant 0 : index
      %c0_130 = arith.constant 0 : index
      %307 = vector.load %arg6[%c0_129, %c0_130] : memref<32x8xf32, #tpu.memory_space<vmem>>, vector<32x8xf32>
      tpu.vector_store %arg6[%c0_129, %c0_130], %306 {strides = array<i32>} : memref<32x8xf32, #tpu.memory_space<vmem>>, vector<32x8xf32>,
    } else {
    }
    %c0 = arith.constant 0 : index
    %c0_1 = arith.constant 0 : index
    %3 = vector.load %arg2[%c0, %c0_1] : memref<32x3xf32, #tpu.memory_space<vmem>>, vector<32x3xf32>
    %c0_2 = arith.constant 0 : index
    %c0_3 = arith.constant 0 : index
    %4 = vector.load %arg3[%c0_2, %c0_3] : memref<32x1xf32, #tpu.memory_space<vmem>>, vector<32x1xf32>
    %cst = arith.constant 0.000000e+00 : f32
    %5 = vector.broadcast %cst : f32 to vector<32x1xf32>
    %cst_4 = arith.constant 0.000000e+00 : f32
    %6 = vector.broadcast %cst_4 : f32 to vector<32x1xf32>
    %c0_5 = arith.constant 0 : index
    %c0_6 = arith.constant 0 : index
    %c0_7 = arith.constant 0 : index
    %7 = vector.load %arg1[%c0_5, %c0_6, %c0_7] : memref<8x3x128xf32, #tpu.memory_space<vmem>>, vector<1x3x128xf32>
    %8 = vector.shape_cast %7 : vector<1x3x128xf32> to vector<3x128xf32>
    %9 = vector.extract_strided_slice %3 {offsets = [0, 0], sizes = [32, 1], strides = [1, 1]} : vector<32x3xf32> to vector<32x1xf32>
    %10 = vector.extract_strided_slice %8 {offsets = [0, 0], sizes = [1, 128], strides = [1, 1]} : vector<3x128xf32> to vector<1x128xf32>
    %11 = vector.broadcast %9 : vector<32x1xf32> to vector<32x128xf32>
    %12 = vector.broadcast %10 : vector<1x128xf32> to vector<32x128xf32>
    %13 = arith.mulf %11, %12 : vector<32x128xf32>
    %14 = vector.extract_strided_slice %3 {offsets = [0, 1], sizes = [32, 1], strides = [1, 1]} : vector<32x3xf32> to vector<32x1xf32>
    %15 = vector.extract_strided_slice %8 {offsets = [1, 0], sizes = [1, 128], strides = [1, 1]} : vector<3x128xf32> to vector<1x128xf32>
    %16 = vector.broadcast %14 : vector<32x1xf32> to vector<32x128xf32>
    %17 = vector.broadcast %15 : vector<1x128xf32> to vector<32x128xf32>
    %18 = arith.mulf %16, %17 : vector<32x128xf32>
    %19 = arith.addf %13, %18 : vector<32x128xf32>
    %20 = vector.extract_strided_slice %3 {offsets = [0, 2], sizes = [32, 1], strides = [1, 1]} : vector<32x3xf32> to vector<32x1xf32>
    %21 = vector.extract_strided_slice %8 {offsets = [2, 0], sizes = [1, 128], strides = [1, 1]} : vector<3x128xf32> to vector<1x128xf32>
    %22 = vector.broadcast %20 : vector<32x1xf32> to vector<32x128xf32>
    %23 = vector.broadcast %21 : vector<1x128xf32> to vector<32x128xf32>
    %24 = arith.mulf %22, %23 : vector<32x128xf32>
    %25 = arith.addf %19, %24 : vector<32x128xf32>
    %26 = vector.broadcast %4 : vector<32x1xf32> to vector<32x128xf32>
    %27 = arith.addf %25, %26 : vector<32x128xf32>
    %cst_8 = arith.constant 0.000000e+00 : f32
    %28 = vector.broadcast %cst_8 : f32 to vector<32x128xf32>
    %29 = arith.maximumf %27, %28 : vector<32x128xf32>
    %cst_9 = arith.constant dense<0.000000e+00> : vector<32xf32>
    %30 = vector.multi_reduction <add>, %29, %cst_9 [1] : vector<32x128xf32> to vector<32xf32>
    %31 = vector.shape_cast %30 : vector<32xf32> to vector<32x1xf32>
    %32 = arith.addf %5, %31 : vector<32x1xf32>
    %cst_10 = arith.constant dense<0xFF800000> : vector<32xf32>
    %33 = vector.multi_reduction <maximumf>, %29, %cst_10 [1] : vector<32x128xf32> to vector<32xf32>
    %34 = vector.shape_cast %33 : vector<32xf32> to vector<32x1xf32>
    %35 = arith.maximumf %6, %34 : vector<32x1xf32>
    %c0_11 = arith.constant 0 : index
    %c0_12 = arith.constant 0 : index
    %36 = vector.load %arg5[%c0_11, %c0_12] : memref<32x8xf32, #tpu.memory_space<vmem>>, vector<32x1xf32>
    %37 = arith.addf %36, %32 : vector<32x1xf32>
    %c0_13 = arith.constant 0 : index
    %c0_14 = arith.constant 0 : index
    %38 = vector.load %arg5[%c0_13, %c0_14] : memref<32x8xf32, #tpu.memory_space<vmem>>, vector<32x1xf32>
    tpu.vector_store %arg5[%c0_13, %c0_14], %37 {strides = array<i32>} : memref<32x8xf32, #tpu.memory_space<vmem>>, vector<32x1xf32>,
    %c0_15 = arith.constant 0 : index
    %c0_16 = arith.constant 0 : index
    %39 = vector.load %arg6[%c0_15, %c0_16] : memref<32x8xf32, #tpu.memory_space<vmem>>, vector<32x1xf32>
    %40 = arith.maximumf %39, %35 : vector<32x1xf32>
    %c0_17 = arith.constant 0 : index
    %c0_18 = arith.constant 0 : index
    %41 = vector.load %arg6[%c0_17, %c0_18] : memref<32x8xf32, #tpu.memory_space<vmem>>, vector<32x1xf32>
    tpu.vector_store %arg6[%c0_17, %c0_18], %40 {strides = array<i32>} : memref<32x8xf32, #tpu.memory_space<vmem>>, vector<32x1xf32>,
    %cst_19 = arith.constant 0.000000e+00 : f32
    %42 = vector.broadcast %cst_19 : f32 to vector<32x1xf32>
    %cst_20 = arith.constant 0.000000e+00 : f32
    %43 = vector.broadcast %cst_20 : f32 to vector<32x1xf32>
    %c1 = arith.constant 1 : index
    %c0_21 = arith.constant 0 : index
    %c0_22 = arith.constant 0 : index
    %44 = vector.load %arg1[%c1, %c0_21, %c0_22] : memref<8x3x128xf32, #tpu.memory_space<vmem>>, vector<1x3x128xf32>
    %45 = vector.shape_cast %44 : vector<1x3x128xf32> to vector<3x128xf32>
    %46 = vector.extract_strided_slice %3 {offsets = [0, 0], sizes = [32, 1], strides = [1, 1]} : vector<32x3xf32> to vector<32x1xf32>
    %47 = vector.extract_strided_slice %45 {offsets = [0, 0], sizes = [1, 128], strides = [1, 1]} : vector<3x128xf32> to vector<1x128xf32>
    %48 = vector.broadcast %46 : vector<32x1xf32> to vector<32x128xf32>
    %49 = vector.broadcast %47 : vector<1x128xf32> to vector<32x128xf32>
    %50 = arith.mulf %48, %49 : vector<32x128xf32>
    %51 = vector.extract_strided_slice %3 {offsets = [0, 1], sizes = [32, 1], strides = [1, 1]} : vector<32x3xf32> to vector<32x1xf32>
    %52 = vector.extract_strided_slice %45 {offsets = [1, 0], sizes = [1, 128], strides = [1, 1]} : vector<3x128xf32> to vector<1x128xf32>
    %53 = vector.broadcast %51 : vector<32x1xf32> to vector<32x128xf32>
    %54 = vector.broadcast %52 : vector<1x128xf32> to vector<32x128xf32>
    %55 = arith.mulf %53, %54 : vector<32x128xf32>
    %56 = arith.addf %50, %55 : vector<32x128xf32>
    %57 = vector.extract_strided_slice %3 {offsets = [0, 2], sizes = [32, 1], strides = [1, 1]} : vector<32x3xf32> to vector<32x1xf32>
    %58 = vector.extract_strided_slice %45 {offsets = [2, 0], sizes = [1, 128], strides = [1, 1]} : vector<3x128xf32> to vector<1x128xf32>
    %59 = vector.broadcast %57 : vector<32x1xf32> to vector<32x128xf32>
    %60 = vector.broadcast %58 : vector<1x128xf32> to vector<32x128xf32>
    %61 = arith.mulf %59, %60 : vector<32x128xf32>
    %62 = arith.addf %56, %61 : vector<32x128xf32>
    %63 = vector.broadcast %4 : vector<32x1xf32> to vector<32x128xf32>
    %64 = arith.addf %62, %63 : vector<32x128xf32>
    %cst_23 = arith.constant 0.000000e+00 : f32
    %65 = vector.broadcast %cst_23 : f32 to vector<32x128xf32>
    %66 = arith.maximumf %64, %65 : vector<32x128xf32>
    %cst_24 = arith.constant dense<0.000000e+00> : vector<32xf32>
    %67 = vector.multi_reduction <add>, %66, %cst_24 [1] : vector<32x128xf32> to vector<32xf32>
    %68 = vector.shape_cast %67 : vector<32xf32> to vector<32x1xf32>
    %69 = arith.addf %42, %68 : vector<32x1xf32>
    %cst_25 = arith.constant dense<0xFF800000> : vector<32xf32>
    %70 = vector.multi_reduction <maximumf>, %66, %cst_25 [1] : vector<32x128xf32> to vector<32xf32>
    %71 = vector.shape_cast %70 : vector<32xf32> to vector<32x1xf32>
    %72 = arith.maximumf %43, %71 : vector<32x1xf32>
    %c0_26 = arith.constant 0 : index
    %c1_27 = arith.constant 1 : index
    %73 = vector.load %arg5[%c0_26, %c1_27] : memref<32x8xf32, #tpu.memory_space<vmem>>, vector<32x1xf32>
    %74 = arith.addf %73, %69 : vector<32x1xf32>
    %c0_28 = arith.constant 0 : index
    %c1_29 = arith.constant 1 : index
    %75 = vector.load %arg5[%c0_28, %c1_29] : memref<32x8xf32, #tpu.memory_space<vmem>>, vector<32x1xf32>
    tpu.vector_store %arg5[%c0_28, %c1_29], %74 {strides = array<i32>} : memref<32x8xf32, #tpu.memory_space<vmem>>, vector<32x1xf32>,
    %c0_30 = arith.constant 0 : index
    %c1_31 = arith.constant 1 : index
    %76 = vector.load %arg6[%c0_30, %c1_31] : memref<32x8xf32, #tpu.memory_space<vmem>>, vector<32x1xf32>
    %77 = arith.maximumf %76, %72 : vector<32x1xf32>
    %c0_32 = arith.constant 0 : index
    %c1_33 = arith.constant 1 : index
    %78 = vector.load %arg6[%c0_32, %c1_33] : memref<32x8xf32, #tpu.memory_space<vmem>>, vector<32x1xf32>
    tpu.vector_store %arg6[%c0_32, %c1_33], %77 {strides = array<i32>} : memref<32x8xf32, #tpu.memory_space<vmem>>, vector<32x1xf32>,
    %cst_34 = arith.constant 0.000000e+00 : f32
    %79 = vector.broadcast %cst_34 : f32 to vector<32x1xf32>
    %cst_35 = arith.constant 0.000000e+00 : f32
    %80 = vector.broadcast %cst_35 : f32 to vector<32x1xf32>
    %c2 = arith.constant 2 : index
    %c0_36 = arith.constant 0 : index
    %c0_37 = arith.constant 0 : index
    %81 = vector.load %arg1[%c2, %c0_36, %c0_37] : memref<8x3x128xf32, #tpu.memory_space<vmem>>, vector<1x3x128xf32>
    %82 = vector.shape_cast %81 : vector<1x3x128xf32> to vector<3x128xf32>
    %83 = vector.extract_strided_slice %3 {offsets = [0, 0], sizes = [32, 1], strides = [1, 1]} : vector<32x3xf32> to vector<32x1xf32>
    %84 = vector.extract_strided_slice %82 {offsets = [0, 0], sizes = [1, 128], strides = [1, 1]} : vector<3x128xf32> to vector<1x128xf32>
    %85 = vector.broadcast %83 : vector<32x1xf32> to vector<32x128xf32>
    %86 = vector.broadcast %84 : vector<1x128xf32> to vector<32x128xf32>
    %87 = arith.mulf %85, %86 : vector<32x128xf32>
    %88 = vector.extract_strided_slice %3 {offsets = [0, 1], sizes = [32, 1], strides = [1, 1]} : vector<32x3xf32> to vector<32x1xf32>
    %89 = vector.extract_strided_slice %82 {offsets = [1, 0], sizes = [1, 128], strides = [1, 1]} : vector<3x128xf32> to vector<1x128xf32>
    %90 = vector.broadcast %88 : vector<32x1xf32> to vector<32x128xf32>
    %91 = vector.broadcast %89 : vector<1x128xf32> to vector<32x128xf32>
    %92 = arith.mulf %90, %91 : vector<32x128xf32>
    %93 = arith.addf %87, %92 : vector<32x128xf32>
    %94 = vector.extract_strided_slice %3 {offsets = [0, 2], sizes = [32, 1], strides = [1, 1]} : vector<32x3xf32> to vector<32x1xf32>
    %95 = vector.extract_strided_slice %82 {offsets = [2, 0], sizes = [1, 128], strides = [1, 1]} : vector<3x128xf32> to vector<1x128xf32>
    %96 = vector.broadcast %94 : vector<32x1xf32> to vector<32x128xf32>
    %97 = vector.broadcast %95 : vector<1x128xf32> to vector<32x128xf32>
    %98 = arith.mulf %96, %97 : vector<32x128xf32>
    %99 = arith.addf %93, %98 : vector<32x128xf32>
    %100 = vector.broadcast %4 : vector<32x1xf32> to vector<32x128xf32>
    %101 = arith.addf %99, %100 : vector<32x128xf32>
    %cst_38 = arith.constant 0.000000e+00 : f32
    %102 = vector.broadcast %cst_38 : f32 to vector<32x128xf32>
    %103 = arith.maximumf %101, %102 : vector<32x128xf32>
    %cst_39 = arith.constant dense<0.000000e+00> : vector<32xf32>
    %104 = vector.multi_reduction <add>, %103, %cst_39 [1] : vector<32x128xf32> to vector<32xf32>
    %105 = vector.shape_cast %104 : vector<32xf32> to vector<32x1xf32>
    %106 = arith.addf %79, %105 : vector<32x1xf32>
    %cst_40 = arith.constant dense<0xFF800000> : vector<32xf32>
    %107 = vector.multi_reduction <maximumf>, %103, %cst_40 [1] : vector<32x128xf32> to vector<32xf32>
    %108 = vector.shape_cast %107 : vector<32xf32> to vector<32x1xf32>
    %109 = arith.maximumf %80, %108 : vector<32x1xf32>
    %c0_41 = arith.constant 0 : index
    %c2_42 = arith.constant 2 : index
    %110 = vector.load %arg5[%c0_41, %c2_42] : memref<32x8xf32, #tpu.memory_space<vmem>>, vector<32x1xf32>
    %111 = arith.addf %110, %106 : vector<32x1xf32>
    %c0_43 = arith.constant 0 : index
    %c2_44 = arith.constant 2 : index
    %112 = vector.load %arg5[%c0_43, %c2_44] : memref<32x8xf32, #tpu.memory_space<vmem>>, vector<32x1xf32>
    tpu.vector_store %arg5[%c0_43, %c2_44], %111 {strides = array<i32>} : memref<32x8xf32, #tpu.memory_space<vmem>>, vector<32x1xf32>,
    %c0_45 = arith.constant 0 : index
    %c2_46 = arith.constant 2 : index
    %113 = vector.load %arg6[%c0_45, %c2_46] : memref<32x8xf32, #tpu.memory_space<vmem>>, vector<32x1xf32>
    %114 = arith.maximumf %113, %109 : vector<32x1xf32>
    %c0_47 = arith.constant 0 : index
    %c2_48 = arith.constant 2 : index
    %115 = vector.load %arg6[%c0_47, %c2_48] : memref<32x8xf32, #tpu.memory_space<vmem>>, vector<32x1xf32>
    tpu.vector_store %arg6[%c0_47, %c2_48], %114 {strides = array<i32>} : memref<32x8xf32, #tpu.memory_space<vmem>>, vector<32x1xf32>,
    %cst_49 = arith.constant 0.000000e+00 : f32
    %116 = vector.broadcast %cst_49 : f32 to vector<32x1xf32>
    %cst_50 = arith.constant 0.000000e+00 : f32
    %117 = vector.broadcast %cst_50 : f32 to vector<32x1xf32>
    %c3 = arith.constant 3 : index
    %c0_51 = arith.constant 0 : index
    %c0_52 = arith.constant 0 : index
    %118 = vector.load %arg1[%c3, %c0_51, %c0_52] : memref<8x3x128xf32, #tpu.memory_space<vmem>>, vector<1x3x128xf32>
    %119 = vector.shape_cast %118 : vector<1x3x128xf32> to vector<3x128xf32>
    %120 = vector.extract_strided_slice %3 {offsets = [0, 0], sizes = [32, 1], strides = [1, 1]} : vector<32x3xf32> to vector<32x1xf32>
    %121 = vector.extract_strided_slice %119 {offsets = [0, 0], sizes = [1, 128], strides = [1, 1]} : vector<3x128xf32> to vector<1x128xf32>
    %122 = vector.broadcast %120 : vector<32x1xf32> to vector<32x128xf32>
    %123 = vector.broadcast %121 : vector<1x128xf32> to vector<32x128xf32>
    %124 = arith.mulf %122, %123 : vector<32x128xf32>
    %125 = vector.extract_strided_slice %3 {offsets = [0, 1], sizes = [32, 1], strides = [1, 1]} : vector<32x3xf32> to vector<32x1xf32>
    %126 = vector.extract_strided_slice %119 {offsets = [1, 0], sizes = [1, 128], strides = [1, 1]} : vector<3x128xf32> to vector<1x128xf32>
    %127 = vector.broadcast %125 : vector<32x1xf32> to vector<32x128xf32>
    %128 = vector.broadcast %126 : vector<1x128xf32> to vector<32x128xf32>
    %129 = arith.mulf %127, %128 : vector<32x128xf32>
    %130 = arith.addf %124, %129 : vector<32x128xf32>
    %131 = vector.extract_strided_slice %3 {offsets = [0, 2], sizes = [32, 1], strides = [1, 1]} : vector<32x3xf32> to vector<32x1xf32>
    %132 = vector.extract_strided_slice %119 {offsets = [2, 0], sizes = [1, 128], strides = [1, 1]} : vector<3x128xf32> to vector<1x128xf32>
    %133 = vector.broadcast %131 : vector<32x1xf32> to vector<32x128xf32>
    %134 = vector.broadcast %132 : vector<1x128xf32> to vector<32x128xf32>
    %135 = arith.mulf %133, %134 : vector<32x128xf32>
    %136 = arith.addf %130, %135 : vector<32x128xf32>
    %137 = vector.broadcast %4 : vector<32x1xf32> to vector<32x128xf32>
    %138 = arith.addf %136, %137 : vector<32x128xf32>
    %cst_53 = arith.constant 0.000000e+00 : f32
    %139 = vector.broadcast %cst_53 : f32 to vector<32x128xf32>
    %140 = arith.maximumf %138, %139 : vector<32x128xf32>
    %cst_54 = arith.constant dense<0.000000e+00> : vector<32xf32>
    %141 = vector.multi_reduction <add>, %140, %cst_54 [1] : vector<32x128xf32> to vector<32xf32>
    %142 = vector.shape_cast %141 : vector<32xf32> to vector<32x1xf32>
    %143 = arith.addf %116, %142 : vector<32x1xf32>
    %cst_55 = arith.constant dense<0xFF800000> : vector<32xf32>
    %144 = vector.multi_reduction <maximumf>, %140, %cst_55 [1] : vector<32x128xf32> to vector<32xf32>
    %145 = vector.shape_cast %144 : vector<32xf32> to vector<32x1xf32>
    %146 = arith.maximumf %117, %145 : vector<32x1xf32>
    %c0_56 = arith.constant 0 : index
    %c3_57 = arith.constant 3 : index
    %147 = vector.load %arg5[%c0_56, %c3_57] : memref<32x8xf32, #tpu.memory_space<vmem>>, vector<32x1xf32>
    %148 = arith.addf %147, %143 : vector<32x1xf32>
    %c0_58 = arith.constant 0 : index
    %c3_59 = arith.constant 3 : index
    %149 = vector.load %arg5[%c0_58, %c3_59] : memref<32x8xf32, #tpu.memory_space<vmem>>, vector<32x1xf32>
    tpu.vector_store %arg5[%c0_58, %c3_59], %148 {strides = array<i32>} : memref<32x8xf32, #tpu.memory_space<vmem>>, vector<32x1xf32>,
    %c0_60 = arith.constant 0 : index
    %c3_61 = arith.constant 3 : index
    %150 = vector.load %arg6[%c0_60, %c3_61] : memref<32x8xf32, #tpu.memory_space<vmem>>, vector<32x1xf32>
    %151 = arith.maximumf %150, %146 : vector<32x1xf32>
    %c0_62 = arith.constant 0 : index
    %c3_63 = arith.constant 3 : index
    %152 = vector.load %arg6[%c0_62, %c3_63] : memref<32x8xf32, #tpu.memory_space<vmem>>, vector<32x1xf32>
    tpu.vector_store %arg6[%c0_62, %c3_63], %151 {strides = array<i32>} : memref<32x8xf32, #tpu.memory_space<vmem>>, vector<32x1xf32>,
    %cst_64 = arith.constant 0.000000e+00 : f32
    %153 = vector.broadcast %cst_64 : f32 to vector<32x1xf32>
    %cst_65 = arith.constant 0.000000e+00 : f32
    %154 = vector.broadcast %cst_65 : f32 to vector<32x1xf32>
    %c4 = arith.constant 4 : index
    %c0_66 = arith.constant 0 : index
    %c0_67 = arith.constant 0 : index
    %155 = vector.load %arg1[%c4, %c0_66, %c0_67] : memref<8x3x128xf32, #tpu.memory_space<vmem>>, vector<1x3x128xf32>
    %156 = vector.shape_cast %155 : vector<1x3x128xf32> to vector<3x128xf32>
    %157 = vector.extract_strided_slice %3 {offsets = [0, 0], sizes = [32, 1], strides = [1, 1]} : vector<32x3xf32> to vector<32x1xf32>
    %158 = vector.extract_strided_slice %156 {offsets = [0, 0], sizes = [1, 128], strides = [1, 1]} : vector<3x128xf32> to vector<1x128xf32>
    %159 = vector.broadcast %157 : vector<32x1xf32> to vector<32x128xf32>
    %160 = vector.broadcast %158 : vector<1x128xf32> to vector<32x128xf32>
    %161 = arith.mulf %159, %160 : vector<32x128xf32>
    %162 = vector.extract_strided_slice %3 {offsets = [0, 1], sizes = [32, 1], strides = [1, 1]} : vector<32x3xf32> to vector<32x1xf32>
    %163 = vector.extract_strided_slice %156 {offsets = [1, 0], sizes = [1, 128], strides = [1, 1]} : vector<3x128xf32> to vector<1x128xf32>
    %164 = vector.broadcast %162 : vector<32x1xf32> to vector<32x128xf32>
    %165 = vector.broadcast %163 : vector<1x128xf32> to vector<32x128xf32>
    %166 = arith.mulf %164, %165 : vector<32x128xf32>
    %167 = arith.addf %161, %166 : vector<32x128xf32>
    %168 = vector.extract_strided_slice %3 {offsets = [0, 2], sizes = [32, 1], strides = [1, 1]} : vector<32x3xf32> to vector<32x1xf32>
    %169 = vector.extract_strided_slice %156 {offsets = [2, 0], sizes = [1, 128], strides = [1, 1]} : vector<3x128xf32> to vector<1x128xf32>
    %170 = vector.broadcast %168 : vector<32x1xf32> to vector<32x128xf32>
    %171 = vector.broadcast %169 : vector<1x128xf32> to vector<32x128xf32>
    %172 = arith.mulf %170, %171 : vector<32x128xf32>
    %173 = arith.addf %167, %172 : vector<32x128xf32>
    %174 = vector.broadcast %4 : vector<32x1xf32> to vector<32x128xf32>
    %175 = arith.addf %173, %174 : vector<32x128xf32>
    %cst_68 = arith.constant 0.000000e+00 : f32
    %176 = vector.broadcast %cst_68 : f32 to vector<32x128xf32>
    %177 = arith.maximumf %175, %176 : vector<32x128xf32>
    %cst_69 = arith.constant dense<0.000000e+00> : vector<32xf32>
    %178 = vector.multi_reduction <add>, %177, %cst_69 [1] : vector<32x128xf32> to vector<32xf32>
    %179 = vector.shape_cast %178 : vector<32xf32> to vector<32x1xf32>
    %180 = arith.addf %153, %179 : vector<32x1xf32>
    %cst_70 = arith.constant dense<0xFF800000> : vector<32xf32>
    %181 = vector.multi_reduction <maximumf>, %177, %cst_70 [1] : vector<32x128xf32> to vector<32xf32>
    %182 = vector.shape_cast %181 : vector<32xf32> to vector<32x1xf32>
    %183 = arith.maximumf %154, %182 : vector<32x1xf32>
    %c0_71 = arith.constant 0 : index
    %c4_72 = arith.constant 4 : index
    %184 = vector.load %arg5[%c0_71, %c4_72] : memref<32x8xf32, #tpu.memory_space<vmem>>, vector<32x1xf32>
    %185 = arith.addf %184, %180 : vector<32x1xf32>
    %c0_73 = arith.constant 0 : index
    %c4_74 = arith.constant 4 : index
    %186 = vector.load %arg5[%c0_73, %c4_74] : memref<32x8xf32, #tpu.memory_space<vmem>>, vector<32x1xf32>
    tpu.vector_store %arg5[%c0_73, %c4_74], %185 {strides = array<i32>} : memref<32x8xf32, #tpu.memory_space<vmem>>, vector<32x1xf32>,
    %c0_75 = arith.constant 0 : index
    %c4_76 = arith.constant 4 : index
    %187 = vector.load %arg6[%c0_75, %c4_76] : memref<32x8xf32, #tpu.memory_space<vmem>>, vector<32x1xf32>
    %188 = arith.maximumf %187, %183 : vector<32x1xf32>
    %c0_77 = arith.constant 0 : index
    %c4_78 = arith.constant 4 : index
    %189 = vector.load %arg6[%c0_77, %c4_78] : memref<32x8xf32, #tpu.memory_space<vmem>>, vector<32x1xf32>
    tpu.vector_store %arg6[%c0_77, %c4_78], %188 {strides = array<i32>} : memref<32x8xf32, #tpu.memory_space<vmem>>, vector<32x1xf32>,
    %cst_79 = arith.constant 0.000000e+00 : f32
    %190 = vector.broadcast %cst_79 : f32 to vector<32x1xf32>
    %cst_80 = arith.constant 0.000000e+00 : f32
    %191 = vector.broadcast %cst_80 : f32 to vector<32x1xf32>
    %c5 = arith.constant 5 : index
    %c0_81 = arith.constant 0 : index
    %c0_82 = arith.constant 0 : index
    %192 = vector.load %arg1[%c5, %c0_81, %c0_82] : memref<8x3x128xf32, #tpu.memory_space<vmem>>, vector<1x3x128xf32>
    %193 = vector.shape_cast %192 : vector<1x3x128xf32> to vector<3x128xf32>
    %194 = vector.extract_strided_slice %3 {offsets = [0, 0], sizes = [32, 1], strides = [1, 1]} : vector<32x3xf32> to vector<32x1xf32>
    %195 = vector.extract_strided_slice %193 {offsets = [0, 0], sizes = [1, 128], strides = [1, 1]} : vector<3x128xf32> to vector<1x128xf32>
    %196 = vector.broadcast %194 : vector<32x1xf32> to vector<32x128xf32>
    %197 = vector.broadcast %195 : vector<1x128xf32> to vector<32x128xf32>
    %198 = arith.mulf %196, %197 : vector<32x128xf32>
    %199 = vector.extract_strided_slice %3 {offsets = [0, 1], sizes = [32, 1], strides = [1, 1]} : vector<32x3xf32> to vector<32x1xf32>
    %200 = vector.extract_strided_slice %193 {offsets = [1, 0], sizes = [1, 128], strides = [1, 1]} : vector<3x128xf32> to vector<1x128xf32>
    %201 = vector.broadcast %199 : vector<32x1xf32> to vector<32x128xf32>
    %202 = vector.broadcast %200 : vector<1x128xf32> to vector<32x128xf32>
    %203 = arith.mulf %201, %202 : vector<32x128xf32>
    %204 = arith.addf %198, %203 : vector<32x128xf32>
    %205 = vector.extract_strided_slice %3 {offsets = [0, 2], sizes = [32, 1], strides = [1, 1]} : vector<32x3xf32> to vector<32x1xf32>
    %206 = vector.extract_strided_slice %193 {offsets = [2, 0], sizes = [1, 128], strides = [1, 1]} : vector<3x128xf32> to vector<1x128xf32>
    %207 = vector.broadcast %205 : vector<32x1xf32> to vector<32x128xf32>
    %208 = vector.broadcast %206 : vector<1x128xf32> to vector<32x128xf32>
    %209 = arith.mulf %207, %208 : vector<32x128xf32>
    %210 = arith.addf %204, %209 : vector<32x128xf32>
    %211 = vector.broadcast %4 : vector<32x1xf32> to vector<32x128xf32>
    %212 = arith.addf %210, %211 : vector<32x128xf32>
    %cst_83 = arith.constant 0.000000e+00 : f32
    %213 = vector.broadcast %cst_83 : f32 to vector<32x128xf32>
    %214 = arith.maximumf %212, %213 : vector<32x128xf32>
    %cst_84 = arith.constant dense<0.000000e+00> : vector<32xf32>
    %215 = vector.multi_reduction <add>, %214, %cst_84 [1] : vector<32x128xf32> to vector<32xf32>
    %216 = vector.shape_cast %215 : vector<32xf32> to vector<32x1xf32>
    %217 = arith.addf %190, %216 : vector<32x1xf32>
    %cst_85 = arith.constant dense<0xFF800000> : vector<32xf32>
    %218 = vector.multi_reduction <maximumf>, %214, %cst_85 [1] : vector<32x128xf32> to vector<32xf32>
    %219 = vector.shape_cast %218 : vector<32xf32> to vector<32x1xf32>
    %220 = arith.maximumf %191, %219 : vector<32x1xf32>
    %c0_86 = arith.constant 0 : index
    %c5_87 = arith.constant 5 : index
    %221 = vector.load %arg5[%c0_86, %c5_87] : memref<32x8xf32, #tpu.memory_space<vmem>>, vector<32x1xf32>
    %222 = arith.addf %221, %217 : vector<32x1xf32>
    %c0_88 = arith.constant 0 : index
    %c5_89 = arith.constant 5 : index
    %223 = vector.load %arg5[%c0_88, %c5_89] : memref<32x8xf32, #tpu.memory_space<vmem>>, vector<32x1xf32>
    tpu.vector_store %arg5[%c0_88, %c5_89], %222 {strides = array<i32>} : memref<32x8xf32, #tpu.memory_space<vmem>>, vector<32x1xf32>,
    %c0_90 = arith.constant 0 : index
    %c5_91 = arith.constant 5 : index
    %224 = vector.load %arg6[%c0_90, %c5_91] : memref<32x8xf32, #tpu.memory_space<vmem>>, vector<32x1xf32>
    %225 = arith.maximumf %224, %220 : vector<32x1xf32>
    %c0_92 = arith.constant 0 : index
    %c5_93 = arith.constant 5 : index
    %226 = vector.load %arg6[%c0_92, %c5_93] : memref<32x8xf32, #tpu.memory_space<vmem>>, vector<32x1xf32>
    tpu.vector_store %arg6[%c0_92, %c5_93], %225 {strides = array<i32>} : memref<32x8xf32, #tpu.memory_space<vmem>>, vector<32x1xf32>,
    %cst_94 = arith.constant 0.000000e+00 : f32
    %227 = vector.broadcast %cst_94 : f32 to vector<32x1xf32>
    %cst_95 = arith.constant 0.000000e+00 : f32
    %228 = vector.broadcast %cst_95 : f32 to vector<32x1xf32>
    %c6 = arith.constant 6 : index
    %c0_96 = arith.constant 0 : index
    %c0_97 = arith.constant 0 : index
    %229 = vector.load %arg1[%c6, %c0_96, %c0_97] : memref<8x3x128xf32, #tpu.memory_space<vmem>>, vector<1x3x128xf32>
    %230 = vector.shape_cast %229 : vector<1x3x128xf32> to vector<3x128xf32>
    %231 = vector.extract_strided_slice %3 {offsets = [0, 0], sizes = [32, 1], strides = [1, 1]} : vector<32x3xf32> to vector<32x1xf32>
    %232 = vector.extract_strided_slice %230 {offsets = [0, 0], sizes = [1, 128], strides = [1, 1]} : vector<3x128xf32> to vector<1x128xf32>
    %233 = vector.broadcast %231 : vector<32x1xf32> to vector<32x128xf32>
    %234 = vector.broadcast %232 : vector<1x128xf32> to vector<32x128xf32>
    %235 = arith.mulf %233, %234 : vector<32x128xf32>
    %236 = vector.extract_strided_slice %3 {offsets = [0, 1], sizes = [32, 1], strides = [1, 1]} : vector<32x3xf32> to vector<32x1xf32>
    %237 = vector.extract_strided_slice %230 {offsets = [1, 0], sizes = [1, 128], strides = [1, 1]} : vector<3x128xf32> to vector<1x128xf32>
    %238 = vector.broadcast %236 : vector<32x1xf32> to vector<32x128xf32>
    %239 = vector.broadcast %237 : vector<1x128xf32> to vector<32x128xf32>
    %240 = arith.mulf %238, %239 : vector<32x128xf32>
    %241 = arith.addf %235, %240 : vector<32x128xf32>
    %242 = vector.extract_strided_slice %3 {offsets = [0, 2], sizes = [32, 1], strides = [1, 1]} : vector<32x3xf32> to vector<32x1xf32>
    %243 = vector.extract_strided_slice %230 {offsets = [2, 0], sizes = [1, 128], strides = [1, 1]} : vector<3x128xf32> to vector<1x128xf32>
    %244 = vector.broadcast %242 : vector<32x1xf32> to vector<32x128xf32>
    %245 = vector.broadcast %243 : vector<1x128xf32> to vector<32x128xf32>
    %246 = arith.mulf %244, %245 : vector<32x128xf32>
    %247 = arith.addf %241, %246 : vector<32x128xf32>
    %248 = vector.broadcast %4 : vector<32x1xf32> to vector<32x128xf32>
    %249 = arith.addf %247, %248 : vector<32x128xf32>
    %cst_98 = arith.constant 0.000000e+00 : f32
    %250 = vector.broadcast %cst_98 : f32 to vector<32x128xf32>
    %251 = arith.maximumf %249, %250 : vector<32x128xf32>
    %cst_99 = arith.constant dense<0.000000e+00> : vector<32xf32>
    %252 = vector.multi_reduction <add>, %251, %cst_99 [1] : vector<32x128xf32> to vector<32xf32>
    %253 = vector.shape_cast %252 : vector<32xf32> to vector<32x1xf32>
    %254 = arith.addf %227, %253 : vector<32x1xf32>
    %cst_100 = arith.constant dense<0xFF800000> : vector<32xf32>
    %255 = vector.multi_reduction <maximumf>, %251, %cst_100 [1] : vector<32x128xf32> to vector<32xf32>
    %256 = vector.shape_cast %255 : vector<32xf32> to vector<32x1xf32>
    %257 = arith.maximumf %228, %256 : vector<32x1xf32>
    %c0_101 = arith.constant 0 : index
    %c6_102 = arith.constant 6 : index
    %258 = vector.load %arg5[%c0_101, %c6_102] : memref<32x8xf32, #tpu.memory_space<vmem>>, vector<32x1xf32>
    %259 = arith.addf %258, %254 : vector<32x1xf32>
    %c0_103 = arith.constant 0 : index
    %c6_104 = arith.constant 6 : index
    %260 = vector.load %arg5[%c0_103, %c6_104] : memref<32x8xf32, #tpu.memory_space<vmem>>, vector<32x1xf32>
    tpu.vector_store %arg5[%c0_103, %c6_104], %259 {strides = array<i32>} : memref<32x8xf32, #tpu.memory_space<vmem>>, vector<32x1xf32>,
    %c0_105 = arith.constant 0 : index
    %c6_106 = arith.constant 6 : index
    %261 = vector.load %arg6[%c0_105, %c6_106] : memref<32x8xf32, #tpu.memory_space<vmem>>, vector<32x1xf32>
    %262 = arith.maximumf %261, %257 : vector<32x1xf32>
    %c0_107 = arith.constant 0 : index
    %c6_108 = arith.constant 6 : index
    %263 = vector.load %arg6[%c0_107, %c6_108] : memref<32x8xf32, #tpu.memory_space<vmem>>, vector<32x1xf32>
    tpu.vector_store %arg6[%c0_107, %c6_108], %262 {strides = array<i32>} : memref<32x8xf32, #tpu.memory_space<vmem>>, vector<32x1xf32>,
    %cst_109 = arith.constant 0.000000e+00 : f32
    %264 = vector.broadcast %cst_109 : f32 to vector<32x1xf32>
    %cst_110 = arith.constant 0.000000e+00 : f32
    %265 = vector.broadcast %cst_110 : f32 to vector<32x1xf32>
    %c7 = arith.constant 7 : index
    %c0_111 = arith.constant 0 : index
    %c0_112 = arith.constant 0 : index
    %266 = vector.load %arg1[%c7, %c0_111, %c0_112] : memref<8x3x128xf32, #tpu.memory_space<vmem>>, vector<1x3x128xf32>
    %267 = vector.shape_cast %266 : vector<1x3x128xf32> to vector<3x128xf32>
    %268 = vector.extract_strided_slice %3 {offsets = [0, 0], sizes = [32, 1], strides = [1, 1]} : vector<32x3xf32> to vector<32x1xf32>
    %269 = vector.extract_strided_slice %267 {offsets = [0, 0], sizes = [1, 128], strides = [1, 1]} : vector<3x128xf32> to vector<1x128xf32>
    %270 = vector.broadcast %268 : vector<32x1xf32> to vector<32x128xf32>
    %271 = vector.broadcast %269 : vector<1x128xf32> to vector<32x128xf32>
    %272 = arith.mulf %270, %271 : vector<32x128xf32>
    %273 = vector.extract_strided_slice %3 {offsets = [0, 1], sizes = [32, 1], strides = [1, 1]} : vector<32x3xf32> to vector<32x1xf32>
    %274 = vector.extract_strided_slice %267 {offsets = [1, 0], sizes = [1, 128], strides = [1, 1]} : vector<3x128xf32> to vector<1x128xf32>
    %275 = vector.broadcast %273 : vector<32x1xf32> to vector<32x128xf32>
    %276 = vector.broadcast %274 : vector<1x128xf32> to vector<32x128xf32>
    %277 = arith.mulf %275, %276 : vector<32x128xf32>
    %278 = arith.addf %272, %277 : vector<32x128xf32>
    %279 = vector.extract_strided_slice %3 {offsets = [0, 2], sizes = [32, 1], strides = [1, 1]} : vector<32x3xf32> to vector<32x1xf32>
    %280 = vector.extract_strided_slice %267 {offsets = [2, 0], sizes = [1, 128], strides = [1, 1]} : vector<3x128xf32> to vector<1x128xf32>
    %281 = vector.broadcast %279 : vector<32x1xf32> to vector<32x128xf32>
    %282 = vector.broadcast %280 : vector<1x128xf32> to vector<32x128xf32>
    %283 = arith.mulf %281, %282 : vector<32x128xf32>
    %284 = arith.addf %278, %283 : vector<32x128xf32>
    %285 = vector.broadcast %4 : vector<32x1xf32> to vector<32x128xf32>
    %286 = arith.addf %284, %285 : vector<32x128xf32>
    %cst_113 = arith.constant 0.000000e+00 : f32
    %287 = vector.broadcast %cst_113 : f32 to vector<32x128xf32>
    %288 = arith.maximumf %286, %287 : vector<32x128xf32>
    %cst_114 = arith.constant dense<0.000000e+00> : vector<32xf32>
    %289 = vector.multi_reduction <add>, %288, %cst_114 [1] : vector<32x128xf32> to vector<32xf32>
    %290 = vector.shape_cast %289 : vector<32xf32> to vector<32x1xf32>
    %291 = arith.addf %264, %290 : vector<32x1xf32>
    %cst_115 = arith.constant dense<0xFF800000> : vector<32xf32>
    %292 = vector.multi_reduction <maximumf>, %288, %cst_115 [1] : vector<32x128xf32> to vector<32xf32>
    %293 = vector.shape_cast %292 : vector<32xf32> to vector<32x1xf32>
    %294 = arith.maximumf %265, %293 : vector<32x1xf32>
    %c0_116 = arith.constant 0 : index
    %c7_117 = arith.constant 7 : index
    %295 = vector.load %arg5[%c0_116, %c7_117] : memref<32x8xf32, #tpu.memory_space<vmem>>, vector<32x1xf32>
    %296 = arith.addf %295, %291 : vector<32x1xf32>
    %c0_118 = arith.constant 0 : index
    %c7_119 = arith.constant 7 : index
    %297 = vector.load %arg5[%c0_118, %c7_119] : memref<32x8xf32, #tpu.memory_space<vmem>>, vector<32x1xf32>
    tpu.vector_store %arg5[%c0_118, %c7_119], %296 {strides = array<i32>} : memref<32x8xf32, #tpu.memory_space<vmem>>, vector<32x1xf32>,
    %c0_120 = arith.constant 0 : index
    %c7_121 = arith.constant 7 : index
    %298 = vector.load %arg6[%c0_120, %c7_121] : memref<32x8xf32, #tpu.memory_space<vmem>>, vector<32x1xf32>
    %299 = arith.maximumf %298, %294 : vector<32x1xf32>
    %c0_122 = arith.constant 0 : index
    %c7_123 = arith.constant 7 : index
    %300 = vector.load %arg6[%c0_122, %c7_123] : memref<32x8xf32, #tpu.memory_space<vmem>>, vector<32x1xf32>
    tpu.vector_store %arg6[%c0_122, %c7_123], %299 {strides = array<i32>} : memref<32x8xf32, #tpu.memory_space<vmem>>, vector<32x1xf32>,
    %c1_i32 = arith.constant 1 : i32
    %301 = arith.cmpi eq, %arg0, %c1_i32 : i32
    %302 = arith.extui %301 : i1 to i32
    %c0_i32_124 = arith.constant 0 : i32
    %303 = arith.cmpi ne, %302, %c0_i32_124 : i32
    scf.if %303 {
      %304 = tpu.iota {dimensions = array<i32: 0>} : vector<32x32xi32>
      %305 = tpu.iota {dimensions = array<i32: 1>} : vector<32x32xi32>
      %306 = arith.cmpi eq, %304, %305 : vector<32x32xi32>
      %307 = arith.extui %306 : vector<32x32xi1> to vector<32x32xi32>
      %308 = arith.sitofp %307 : vector<32x32xi32> to vector<32x32xf32>
      %c0_125 = arith.constant 0 : index
      %c0_126 = arith.constant 0 : index
      %309 = vector.load %arg6[%c0_125, %c0_126] : memref<32x8xf32, #tpu.memory_space<vmem>>, vector<32x1xf32>
      %310 = vector.broadcast %309 : vector<32x1xf32> to vector<32x32xf32>
      %311 = arith.mulf %310, %308 : vector<32x32xf32>
      %cst_127 = arith.constant dense<0.000000e+00> : vector<32xf32>
      %312 = vector.multi_reduction <add>, %311, %cst_127 [0] : vector<32x32xf32> to vector<32xf32>
      %313 = vector.shape_cast %312 : vector<32xf32> to vector<1x32xf32>
      %c0_128 = arith.constant 0 : index
      %c0_129 = arith.constant 0 : index
      %314 = vector.load %arg5[%c0_128, %c0_129] : memref<32x8xf32, #tpu.memory_space<vmem>>, vector<32x1xf32>
      %315 = vector.broadcast %314 : vector<32x1xf32> to vector<32x32xf32>
      %316 = arith.mulf %315, %308 : vector<32x32xf32>
      %cst_130 = arith.constant dense<0.000000e+00> : vector<32xf32>
      %317 = vector.multi_reduction <add>, %316, %cst_130 [0] : vector<32x32xf32> to vector<32xf32>
      %318 = vector.shape_cast %317 : vector<32xf32> to vector<1x32xf32>
      %cst_131 = arith.constant 3.906250e-03 : f32
      %319 = vector.broadcast %cst_131 : f32 to vector<1x32xf32>
      %320 = arith.mulf %318, %319 : vector<1x32xf32>
      %c0_132 = arith.constant 0 : index
      %c0_133 = arith.constant 0 : index
      %c0_134 = arith.constant 0 : index
      %321 = vector.load %arg4[%c0_132, %c0_133, %c0_134] : memref<1x8x64xf32, #tpu.memory_space<vmem>>, vector<1x1x32xf32>
      %322 = vector.shape_cast %321 : vector<1x1x32xf32> to vector<1x32xf32>
      %323 = vector.shape_cast %313 : vector<1x32xf32> to vector<1x1x32xf32>
      tpu.vector_store %arg4[%c0_132, %c0_133, %c0_134], %323 {strides = array<i32>} : memref<1x8x64xf32, #tpu.memory_space<vmem>>, vector<1x1x32xf32>,
      %c0_135 = arith.constant 0 : index
      %c0_136 = arith.constant 0 : index
      %c32 = arith.constant 32 : index
      %324 = vector.load %arg4[%c0_135, %c0_136, %c32] : memref<1x8x64xf32, #tpu.memory_space<vmem>>, vector<1x1x32xf32>
      %325 = vector.shape_cast %324 : vector<1x1x32xf32> to vector<1x32xf32>
      %326 = vector.shape_cast %320 : vector<1x32xf32> to vector<1x1x32xf32>
      tpu.vector_store %arg4[%c0_135, %c0_136, %c32], %326 {strides = array<i32>} : memref<1x8x64xf32, #tpu.memory_space<vmem>>, vector<1x1x32xf32>,
      %c0_137 = arith.constant 0 : index
      %c1_138 = arith.constant 1 : index
      %327 = vector.load %arg6[%c0_137, %c1_138] : memref<32x8xf32, #tpu.memory_space<vmem>>, vector<32x1xf32>
      %328 = vector.broadcast %327 : vector<32x1xf32> to vector<32x32xf32>
      %329 = arith.mulf %328, %308 : vector<32x32xf32>
      %cst_139 = arith.constant dense<0.000000e+00> : vector<32xf32>
      %330 = vector.multi_reduction <add>, %329, %cst_139 [0] : vector<32x32xf32> to vector<32xf32>
      %331 = vector.shape_cast %330 : vector<32xf32> to vector<1x32xf32>
      %c0_140 = arith.constant 0 : index
      %c1_141 = arith.constant 1 : index
      %332 = vector.load %arg5[%c0_140, %c1_141] : memref<32x8xf32, #tpu.memory_space<vmem>>, vector<32x1xf32>
      %333 = vector.broadcast %332 : vector<32x1xf32> to vector<32x32xf32>
      %334 = arith.mulf %333, %308 : vector<32x32xf32>
      %cst_142 = arith.constant dense<0.000000e+00> : vector<32xf32>
      %335 = vector.multi_reduction <add>, %334, %cst_142 [0] : vector<32x32xf32> to vector<32xf32>
      %336 = vector.shape_cast %335 : vector<32xf32> to vector<1x32xf32>
      %cst_143 = arith.constant 3.906250e-03 : f32
      %337 = vector.broadcast %cst_143 : f32 to vector<1x32xf32>
      %338 = arith.mulf %336, %337 : vector<1x32xf32>
      %c0_144 = arith.constant 0 : index
      %c2_145 = arith.constant 2 : index
      %c0_146 = arith.constant 0 : index
      %339 = vector.load %arg4[%c0_144, %c2_145, %c0_146] : memref<1x8x64xf32, #tpu.memory_space<vmem>>, vector<1x1x32xf32>
      %340 = vector.shape_cast %339 : vector<1x1x32xf32> to vector<1x32xf32>
      %341 = vector.shape_cast %331 : vector<1x32xf32> to vector<1x1x32xf32>
      tpu.vector_store %arg4[%c0_144, %c2_145, %c0_146], %341 {strides = array<i32>} : memref<1x8x64xf32, #tpu.memory_space<vmem>>, vector<1x1x32xf32>,
      %c0_147 = arith.constant 0 : index
      %c2_148 = arith.constant 2 : index
      %c32_149 = arith.constant 32 : index
      %342 = vector.load %arg4[%c0_147, %c2_148, %c32_149] : memref<1x8x64xf32, #tpu.memory_space<vmem>>, vector<1x1x32xf32>
      %343 = vector.shape_cast %342 : vector<1x1x32xf32> to vector<1x32xf32>
      %344 = vector.shape_cast %338 : vector<1x32xf32> to vector<1x1x32xf32>
      tpu.vector_store %arg4[%c0_147, %c2_148, %c32_149], %344 {strides = array<i32>} : memref<1x8x64xf32, #tpu.memory_space<vmem>>, vector<1x1x32xf32>,
      %c0_150 = arith.constant 0 : index
      %c2_151 = arith.constant 2 : index
      %345 = vector.load %arg6[%c0_150, %c2_151] : memref<32x8xf32, #tpu.memory_space<vmem>>, vector<32x1xf32>
      %346 = vector.broadcast %345 : vector<32x1xf32> to vector<32x32xf32>
      %347 = arith.mulf %346, %308 : vector<32x32xf32>
      %cst_152 = arith.constant dense<0.000000e+00> : vector<32xf32>
      %348 = vector.multi_reduction <add>, %347, %cst_152 [0] : vector<32x32xf32> to vector<32xf32>
      %349 = vector.shape_cast %348 : vector<32xf32> to vector<1x32xf32>
      %c0_153 = arith.constant 0 : index
      %c2_154 = arith.constant 2 : index
      %350 = vector.load %arg5[%c0_153, %c2_154] : memref<32x8xf32, #tpu.memory_space<vmem>>, vector<32x1xf32>
      %351 = vector.broadcast %350 : vector<32x1xf32> to vector<32x32xf32>
      %352 = arith.mulf %351, %308 : vector<32x32xf32>
      %cst_155 = arith.constant dense<0.000000e+00> : vector<32xf32>
      %353 = vector.multi_reduction <add>, %352, %cst_155 [0] : vector<32x32xf32> to vector<32xf32>
      %354 = vector.shape_cast %353 : vector<32xf32> to vector<1x32xf32>
      %cst_156 = arith.constant 3.906250e-03 : f32
      %355 = vector.broadcast %cst_156 : f32 to vector<1x32xf32>
      %356 = arith.mulf %354, %355 : vector<1x32xf32>
      %c0_157 = arith.constant 0 : index
      %c4_158 = arith.constant 4 : index
      %c0_159 = arith.constant 0 : index
      %357 = vector.load %arg4[%c0_157, %c4_158, %c0_159] : memref<1x8x64xf32, #tpu.memory_space<vmem>>, vector<1x1x32xf32>
      %358 = vector.shape_cast %357 : vector<1x1x32xf32> to vector<1x32xf32>
      %359 = vector.shape_cast %349 : vector<1x32xf32> to vector<1x1x32xf32>
      tpu.vector_store %arg4[%c0_157, %c4_158, %c0_159], %359 {strides = array<i32>} : memref<1x8x64xf32, #tpu.memory_space<vmem>>, vector<1x1x32xf32>,
      %c0_160 = arith.constant 0 : index
      %c4_161 = arith.constant 4 : index
      %c32_162 = arith.constant 32 : index
      %360 = vector.load %arg4[%c0_160, %c4_161, %c32_162] : memref<1x8x64xf32, #tpu.memory_space<vmem>>, vector<1x1x32xf32>
      %361 = vector.shape_cast %360 : vector<1x1x32xf32> to vector<1x32xf32>
      %362 = vector.shape_cast %356 : vector<1x32xf32> to vector<1x1x32xf32>
      tpu.vector_store %arg4[%c0_160, %c4_161, %c32_162], %362 {strides = array<i32>} : memref<1x8x64xf32, #tpu.memory_space<vmem>>, vector<1x1x32xf32>,
      %c0_163 = arith.constant 0 : index
      %c3_164 = arith.constant 3 : index
      %363 = vector.load %arg6[%c0_163, %c3_164] : memref<32x8xf32, #tpu.memory_space<vmem>>, vector<32x1xf32>
      %364 = vector.broadcast %363 : vector<32x1xf32> to vector<32x32xf32>
      %365 = arith.mulf %364, %308 : vector<32x32xf32>
      %cst_165 = arith.constant dense<0.000000e+00> : vector<32xf32>
      %366 = vector.multi_reduction <add>, %365, %cst_165 [0] : vector<32x32xf32> to vector<32xf32>
      %367 = vector.shape_cast %366 : vector<32xf32> to vector<1x32xf32>
      %c0_166 = arith.constant 0 : index
      %c3_167 = arith.constant 3 : index
      %368 = vector.load %arg5[%c0_166, %c3_167] : memref<32x8xf32, #tpu.memory_space<vmem>>, vector<32x1xf32>
      %369 = vector.broadcast %368 : vector<32x1xf32> to vector<32x32xf32>
      %370 = arith.mulf %369, %308 : vector<32x32xf32>
      %cst_168 = arith.constant dense<0.000000e+00> : vector<32xf32>
      %371 = vector.multi_reduction <add>, %370, %cst_168 [0] : vector<32x32xf32> to vector<32xf32>
      %372 = vector.shape_cast %371 : vector<32xf32> to vector<1x32xf32>
      %cst_169 = arith.constant 3.906250e-03 : f32
      %373 = vector.broadcast %cst_169 : f32 to vector<1x32xf32>
      %374 = arith.mulf %372, %373 : vector<1x32xf32>
      %c0_170 = arith.constant 0 : index
      %c6_171 = arith.constant 6 : index
      %c0_172 = arith.constant 0 : index
      %375 = vector.load %arg4[%c0_170, %c6_171, %c0_172] : memref<1x8x64xf32, #tpu.memory_space<vmem>>, vector<1x1x32xf32>
      %376 = vector.shape_cast %375 : vector<1x1x32xf32> to vector<1x32xf32>
      %377 = vector.shape_cast %367 : vector<1x32xf32> to vector<1x1x32xf32>
      tpu.vector_store %arg4[%c0_170, %c6_171, %c0_172], %377 {strides = array<i32>} : memref<1x8x64xf32, #tpu.memory_space<vmem>>, vector<1x1x32xf32>,
      %c0_173 = arith.constant 0 : index
      %c6_174 = arith.constant 6 : index
      %c32_175 = arith.constant 32 : index
      %378 = vector.load %arg4[%c0_173, %c6_174, %c32_175] : memref<1x8x64xf32, #tpu.memory_space<vmem>>, vector<1x1x32xf32>
      %379 = vector.shape_cast %378 : vector<1x1x32xf32> to vector<1x32xf32>
      %380 = vector.shape_cast %374 : vector<1x32xf32> to vector<1x1x32xf32>
      tpu.vector_store %arg4[%c0_173, %c6_174, %c32_175], %380 {strides = array<i32>} : memref<1x8x64xf32, #tpu.memory_space<vmem>>, vector<1x1x32xf32>,
      %c0_176 = arith.constant 0 : index
      %c4_177 = arith.constant 4 : index
      %381 = vector.load %arg6[%c0_176, %c4_177] : memref<32x8xf32, #tpu.memory_space<vmem>>, vector<32x1xf32>
      %382 = vector.broadcast %381 : vector<32x1xf32> to vector<32x32xf32>
      %383 = arith.mulf %382, %308 : vector<32x32xf32>
      %cst_178 = arith.constant dense<0.000000e+00> : vector<32xf32>
      %384 = vector.multi_reduction <add>, %383, %cst_178 [0] : vector<32x32xf32> to vector<32xf32>
      %385 = vector.shape_cast %384 : vector<32xf32> to vector<1x32xf32>
      %c0_179 = arith.constant 0 : index
      %c4_180 = arith.constant 4 : index
      %386 = vector.load %arg5[%c0_179, %c4_180] : memref<32x8xf32, #tpu.memory_space<vmem>>, vector<32x1xf32>
      %387 = vector.broadcast %386 : vector<32x1xf32> to vector<32x32xf32>
      %388 = arith.mulf %387, %308 : vector<32x32xf32>
      %cst_181 = arith.constant dense<0.000000e+00> : vector<32xf32>
      %389 = vector.multi_reduction <add>, %388, %cst_181 [0] : vector<32x32xf32> to vector<32xf32>
      %390 = vector.shape_cast %389 : vector<32xf32> to vector<1x32xf32>
      %cst_182 = arith.constant 3.906250e-03 : f32
      %391 = vector.broadcast %cst_182 : f32 to vector<1x32xf32>
      %392 = arith.mulf %390, %391 : vector<1x32xf32>
      %c0_183 = arith.constant 0 : index
      %c1_184 = arith.constant 1 : index
      %c0_185 = arith.constant 0 : index
      %393 = vector.load %arg4[%c0_183, %c1_184, %c0_185] : memref<1x8x64xf32, #tpu.memory_space<vmem>>, vector<1x1x32xf32>
      %394 = vector.shape_cast %393 : vector<1x1x32xf32> to vector<1x32xf32>
      %395 = vector.shape_cast %385 : vector<1x32xf32> to vector<1x1x32xf32>
      tpu.vector_store %arg4[%c0_183, %c1_184, %c0_185], %395 {strides = array<i32>} : memref<1x8x64xf32, #tpu.memory_space<vmem>>, vector<1x1x32xf32>,
      %c0_186 = arith.constant 0 : index
      %c1_187 = arith.constant 1 : index
      %c32_188 = arith.constant 32 : index
      %396 = vector.load %arg4[%c0_186, %c1_187, %c32_188] : memref<1x8x64xf32, #tpu.memory_space<vmem>>, vector<1x1x32xf32>
      %397 = vector.shape_cast %396 : vector<1x1x32xf32> to vector<1x32xf32>
      %398 = vector.shape_cast %392 : vector<1x32xf32> to vector<1x1x32xf32>
      tpu.vector_store %arg4[%c0_186, %c1_187, %c32_188], %398 {strides = array<i32>} : memref<1x8x64xf32, #tpu.memory_space<vmem>>, vector<1x1x32xf32>,
      %c0_189 = arith.constant 0 : index
      %c5_190 = arith.constant 5 : index
      %399 = vector.load %arg6[%c0_189, %c5_190] : memref<32x8xf32, #tpu.memory_space<vmem>>, vector<32x1xf32>
      %400 = vector.broadcast %399 : vector<32x1xf32> to vector<32x32xf32>
      %401 = arith.mulf %400, %308 : vector<32x32xf32>
      %cst_191 = arith.constant dense<0.000000e+00> : vector<32xf32>
      %402 = vector.multi_reduction <add>, %401, %cst_191 [0] : vector<32x32xf32> to vector<32xf32>
      %403 = vector.shape_cast %402 : vector<32xf32> to vector<1x32xf32>
      %c0_192 = arith.constant 0 : index
      %c5_193 = arith.constant 5 : index
      %404 = vector.load %arg5[%c0_192, %c5_193] : memref<32x8xf32, #tpu.memory_space<vmem>>, vector<32x1xf32>
      %405 = vector.broadcast %404 : vector<32x1xf32> to vector<32x32xf32>
      %406 = arith.mulf %405, %308 : vector<32x32xf32>
      %cst_194 = arith.constant dense<0.000000e+00> : vector<32xf32>
      %407 = vector.multi_reduction <add>, %406, %cst_194 [0] : vector<32x32xf32> to vector<32xf32>
      %408 = vector.shape_cast %407 : vector<32xf32> to vector<1x32xf32>
      %cst_195 = arith.constant 3.906250e-03 : f32
      %409 = vector.broadcast %cst_195 : f32 to vector<1x32xf32>
      %410 = arith.mulf %408, %409 : vector<1x32xf32>
      %c0_196 = arith.constant 0 : index
      %c3_197 = arith.constant 3 : index
      %c0_198 = arith.constant 0 : index
      %411 = vector.load %arg4[%c0_196, %c3_197, %c0_198] : memref<1x8x64xf32, #tpu.memory_space<vmem>>, vector<1x1x32xf32>
      %412 = vector.shape_cast %411 : vector<1x1x32xf32> to vector<1x32xf32>
      %413 = vector.shape_cast %403 : vector<1x32xf32> to vector<1x1x32xf32>
      tpu.vector_store %arg4[%c0_196, %c3_197, %c0_198], %413 {strides = array<i32>} : memref<1x8x64xf32, #tpu.memory_space<vmem>>, vector<1x1x32xf32>,
      %c0_199 = arith.constant 0 : index
      %c3_200 = arith.constant 3 : index
      %c32_201 = arith.constant 32 : index
      %414 = vector.load %arg4[%c0_199, %c3_200, %c32_201] : memref<1x8x64xf32, #tpu.memory_space<vmem>>, vector<1x1x32xf32>
      %415 = vector.shape_cast %414 : vector<1x1x32xf32> to vector<1x32xf32>
      %416 = vector.shape_cast %410 : vector<1x32xf32> to vector<1x1x32xf32>
      tpu.vector_store %arg4[%c0_199, %c3_200, %c32_201], %416 {strides = array<i32>} : memref<1x8x64xf32, #tpu.memory_space<vmem>>, vector<1x1x32xf32>,
      %c0_202 = arith.constant 0 : index
      %c6_203 = arith.constant 6 : index
      %417 = vector.load %arg6[%c0_202, %c6_203] : memref<32x8xf32, #tpu.memory_space<vmem>>, vector<32x1xf32>
      %418 = vector.broadcast %417 : vector<32x1xf32> to vector<32x32xf32>
      %419 = arith.mulf %418, %308 : vector<32x32xf32>
      %cst_204 = arith.constant dense<0.000000e+00> : vector<32xf32>
      %420 = vector.multi_reduction <add>, %419, %cst_204 [0] : vector<32x32xf32> to vector<32xf32>
      %421 = vector.shape_cast %420 : vector<32xf32> to vector<1x32xf32>
      %c0_205 = arith.constant 0 : index
      %c6_206 = arith.constant 6 : index
      %422 = vector.load %arg5[%c0_205, %c6_206] : memref<32x8xf32, #tpu.memory_space<vmem>>, vector<32x1xf32>
      %423 = vector.broadcast %422 : vector<32x1xf32> to vector<32x32xf32>
      %424 = arith.mulf %423, %308 : vector<32x32xf32>
      %cst_207 = arith.constant dense<0.000000e+00> : vector<32xf32>
      %425 = vector.multi_reduction <add>, %424, %cst_207 [0] : vector<32x32xf32> to vector<32xf32>
      %426 = vector.shape_cast %425 : vector<32xf32> to vector<1x32xf32>
      %cst_208 = arith.constant 3.906250e-03 : f32
      %427 = vector.broadcast %cst_208 : f32 to vector<1x32xf32>
      %428 = arith.mulf %426, %427 : vector<1x32xf32>
      %c0_209 = arith.constant 0 : index
      %c5_210 = arith.constant 5 : index
      %c0_211 = arith.constant 0 : index
      %429 = vector.load %arg4[%c0_209, %c5_210, %c0_211] : memref<1x8x64xf32, #tpu.memory_space<vmem>>, vector<1x1x32xf32>
      %430 = vector.shape_cast %429 : vector<1x1x32xf32> to vector<1x32xf32>
      %431 = vector.shape_cast %421 : vector<1x32xf32> to vector<1x1x32xf32>
      tpu.vector_store %arg4[%c0_209, %c5_210, %c0_211], %431 {strides = array<i32>} : memref<1x8x64xf32, #tpu.memory_space<vmem>>, vector<1x1x32xf32>,
      %c0_212 = arith.constant 0 : index
      %c5_213 = arith.constant 5 : index
      %c32_214 = arith.constant 32 : index
      %432 = vector.load %arg4[%c0_212, %c5_213, %c32_214] : memref<1x8x64xf32, #tpu.memory_space<vmem>>, vector<1x1x32xf32>
      %433 = vector.shape_cast %432 : vector<1x1x32xf32> to vector<1x32xf32>
      %434 = vector.shape_cast %428 : vector<1x32xf32> to vector<1x1x32xf32>
      tpu.vector_store %arg4[%c0_212, %c5_213, %c32_214], %434 {strides = array<i32>} : memref<1x8x64xf32, #tpu.memory_space<vmem>>, vector<1x1x32xf32>,
      %c0_215 = arith.constant 0 : index
      %c7_216 = arith.constant 7 : index
      %435 = vector.load %arg6[%c0_215, %c7_216] : memref<32x8xf32, #tpu.memory_space<vmem>>, vector<32x1xf32>
      %436 = vector.broadcast %435 : vector<32x1xf32> to vector<32x32xf32>
      %437 = arith.mulf %436, %308 : vector<32x32xf32>
      %cst_217 = arith.constant dense<0.000000e+00> : vector<32xf32>
      %438 = vector.multi_reduction <add>, %437, %cst_217 [0] : vector<32x32xf32> to vector<32xf32>
      %439 = vector.shape_cast %438 : vector<32xf32> to vector<1x32xf32>
      %c0_218 = arith.constant 0 : index
      %c7_219 = arith.constant 7 : index
      %440 = vector.load %arg5[%c0_218, %c7_219] : memref<32x8xf32, #tpu.memory_space<vmem>>, vector<32x1xf32>
      %441 = vector.broadcast %440 : vector<32x1xf32> to vector<32x32xf32>
      %442 = arith.mulf %441, %308 : vector<32x32xf32>
      %cst_220 = arith.constant dense<0.000000e+00> : vector<32xf32>
      %443 = vector.multi_reduction <add>, %442, %cst_220 [0] : vector<32x32xf32> to vector<32xf32>
      %444 = vector.shape_cast %443 : vector<32xf32> to vector<1x32xf32>
      %cst_221 = arith.constant 3.906250e-03 : f32
      %445 = vector.broadcast %cst_221 : f32 to vector<1x32xf32>
      %446 = arith.mulf %444, %445 : vector<1x32xf32>
      %c0_222 = arith.constant 0 : index
      %c7_223 = arith.constant 7 : index
      %c0_224 = arith.constant 0 : index
      %447 = vector.load %arg4[%c0_222, %c7_223, %c0_224] : memref<1x8x64xf32, #tpu.memory_space<vmem>>, vector<1x1x32xf32>
      %448 = vector.shape_cast %447 : vector<1x1x32xf32> to vector<1x32xf32>
      %449 = vector.shape_cast %439 : vector<1x32xf32> to vector<1x1x32xf32>
      tpu.vector_store %arg4[%c0_222, %c7_223, %c0_224], %449 {strides = array<i32>} : memref<1x8x64xf32, #tpu.memory_space<vmem>>, vector<1x1x32xf32>,
      %c0_225 = arith.constant 0 : index
      %c7_226 = arith.constant 7 : index
      %c32_227 = arith.constant 32 : index
      %450 = vector.load %arg4[%c0_225, %c7_226, %c32_227] : memref<1x8x64xf32, #tpu.memory_space<vmem>>, vector<1x1x32xf32>
      %451 = vector.shape_cast %450 : vector<1x1x32xf32> to vector<1x32xf32>
      %452 = vector.shape_cast %446 : vector<1x32xf32> to vector<1x1x32xf32>
      tpu.vector_store %arg4[%c0_225, %c7_226, %c32_227], %452 {strides = array<i32>} : memref<1x8x64xf32, #tpu.memory_space<vmem>>, vector<1x1x32xf32>,
    } else {
    }
    return
  }
  func.func @transform_0(%arg0: i32) -> (i32, i32, i32) {
    %c0_i32 = arith.constant 0 : i32
    %c0_i32_0 = arith.constant 0 : i32
    %c0_i32_1 = arith.constant 0 : i32
    return %c0_i32, %c0_i32_0, %arg0 : i32, i32, i32
  }
  func.func @transform_1(%arg0: i32) -> (i32, i32) {
    %c0_i32 = arith.constant 0 : i32
    %c0_i32_0 = arith.constant 0 : i32
    %c0_i32_1 = arith.constant 0 : i32
    return %c0_i32, %c0_i32_0 : i32, i32
  }
  func.func @transform_2(%arg0: i32) -> (i32, i32) {
    %c0_i32 = arith.constant 0 : i32
    %c0_i32_0 = arith.constant 0 : i32
    %c0_i32_1 = arith.constant 0 : i32
    return %c0_i32, %c0_i32_0 : i32, i32
  }
  func.func @transform_3(%arg0: i32) -> (i32, i32, i32) {
    %c0_i32 = arith.constant 0 : i32
    %c0_i32_0 = arith.constant 0 : i32
    %c0_i32_1 = arith.constant 0 : i32
    %c0_i32_2 = arith.constant 0 : i32
    return %c0_i32, %c0_i32_0, %c0_i32_1 : i32, i32, i32
  }
}

</mosaic_0001>

<llo_original>
// kernel: tpu_custom_call.1
$region0: #{tpu_custom_call.1}
  #allocation0 [shape = 'u32[]', space=smem, size = 0x4, offset = 0x4, fixed_abs, tag = 'smem constant byte address 0x4 - core index']
  #allocation1 [shape = 'u32[144,128]{1,0:T(1,128)}', space=vmem, size = 0x12000, scoped, tag = 'internal scratch']
  #allocation2 [shape = 'f32[32,8]{1,0:T(8,128)}', space=vmem, size = 0x4000, scoped, tag = 'scratch operand']
  #allocation3 [shape = 'f32[32,8]{1,0:T(8,128)}', space=vmem, size = 0x4000, scoped, tag = 'scratch operand']
  %s0 = inlined_call_operand.vmem [shape: f32[8,3,256], index: 0, kind: input, shape index: {}]
  %s1 = inlined_call_operand.vmem [shape: f32[32,3], index: 1, kind: input, shape index: {}]
  %s2 = inlined_call_operand.vmem [shape: f32[32,1], index: 2, kind: input, shape index: {}]
  %s3 = inlined_call_operand.hbm [shape: f32[1,8,64], index: 3, kind: output, shape index: {}]
  %s4 = sld [smem:[#allocation0]]
  $region94: #{tpu_custom_call.1} parent=0
    _
  %s6 = ssub.s32 1, %s4
  %s7 = scalar_select 0, %s6, %s4
  $region1: #{tpu_custom_call.1} parent=0
    #allocation4 [shape = 'u8[32768]{0}', space=vmem, size = 0x8000, scoped, tag = 'input window, operand 0']
    #allocation5 [shape = 'u8[4096]{0}', space=vmem, size = 0x1000, scoped, tag = 'output window, operand 0, single buffered']
    #allocation6 [shape = 's32[2]{0}', space=sflag, size = 0x8, scoped, tag = 'scoped memory for tpu_custom_call.1']
    %8 = vsyncpa [#allocation6], 0
    loop: start=0, step=1, limit=4
    $region2: #{tpu_custom_call.1} parent=1 // loop_pre_header
      _
    $region3: #{tpu_custom_call.1} parent=1 // loop_header
      %s10 = sphi 0, %s14
      %p11 = scmp.ge.s32.totalorder %s10, 4
      %s20 = sphi 0, %s22
      %s23 = sphi 0, %s20
      %s24 = sphi 0, %s23
      %s40 = sphi 0, %s24
      %s44 = sphi 0, %s44
      %s46 = sphi 0, %s44
      %s47 = sphi 0, %s46
      %s61 = sphi 0, %s47
      %s65 = sphi 0, %s65
      %s67 = sphi 0, %s65
      %s68 = sphi 0, %s67
      %s82 = sphi 0, %s68
      %s86 = sphi 0, %s86
      %s88 = sphi 0, %s86
      %s89 = sphi 0, %s88
      %s103 = sphi 0, %s89
    $region4: #{tpu_custom_call.1} parent=1 // loop_header_branch
      %13 = sbr.rel (%p11) target = $region8
    $region5: #{tpu_custom_call.1} parent=1 // loop_body
      %s15 = ssub.s32 %s10, 1
      %s16 = ssub.s32 %s10, 2
      %s17 = sadd.s32 %s10, 1
      %s18 = ssub.s32 %s10, %s17
      %p19 = scmp.eq.s32.totalorder %s18, 0
      %s21 = sadd.s32 %s20, 1
      %s22 = scalar_select %p19, %s20, %s21
      %p25 = pneg %p19
      %p26 = scmp.eq.s32.totalorder %s10, 1
      %p27 = por %p25, %p26
      %p28 = scmp.ne.s32.totalorder %s20, %s23
      %p29 = scmp.eq.s32.totalorder %s10, 0
      %p30 = por %p28, %p29
      %p31 = scmp.ne.s32.totalorder %s20, %s23
      %p32 = scmp.eq.s32.totalorder %s15, 1
      %p33 = por %p31, %p32
      %p34 = scmp.ne.s32.totalorder %s23, %s24
      %p35 = scmp.eq.s32.totalorder %s15, 0
      %p36 = por %p34, %p35
      %p37 = scmp.ne.s32.totalorder %s23, %s24
      %p38 = scmp.eq.s32.totalorder %s16, 1
      %p39 = por %p37, %p38
      %p41 = scmp.ne.s32.totalorder %s24, %s40
      %p42 = scmp.eq.s32.totalorder %s16, 0
      %p43 = por %p41, %p42
      %s45 = sadd.s32 %s44, 1
      %p48 = scmp.eq.s32.totalorder %s10, 1
      %p49 = scmp.ne.s32.totalorder %s44, %s46
      %p50 = scmp.eq.s32.totalorder %s10, 0
      %p51 = por %p49, %p50
      %p52 = scmp.ne.s32.totalorder %s44, %s46
      %p53 = scmp.eq.s32.totalorder %s15, 1
      %p54 = por %p52, %p53
      %p55 = scmp.ne.s32.totalorder %s46, %s47
      %p56 = scmp.eq.s32.totalorder %s15, 0
      %p57 = por %p55, %p56
      %p58 = scmp.ne.s32.totalorder %s46, %s47
      %p59 = scmp.eq.s32.totalorder %s16, 1
      %p60 = por %p58, %p59
      %p62 = scmp.ne.s32.totalorder %s47, %s61
      %p63 = scmp.eq.s32.totalorder %s16, 0
      %p64 = por %p62, %p63
      %s66 = sadd.s32 %s65, 1
      %p69 = scmp.eq.s32.totalorder %s10, 1
      %p70 = scmp.ne.s32.totalorder %s65, %s67
      %p71 = scmp.eq.s32.totalorder %s10, 0
      %p72 = por %p70, %p71
      %p73 = scmp.ne.s32.totalorder %s65, %s67
      %p74 = scmp.eq.s32.totalorder %s15, 1
      %p75 = por %p73, %p74
      %p76 = scmp.ne.s32.totalorder %s67, %s68
      %p77 = scmp.eq.s32.totalorder %s15, 0
      %p78 = por %p76, %p77
      %p79 = scmp.ne.s32.totalorder %s67, %s68
      %p80 = scmp.eq.s32.totalorder %s16, 1
      %p81 = por %p79, %p80
      %p83 = scmp.ne.s32.totalorder %s68, %s82
      %p84 = scmp.eq.s32.totalorder %s16, 0
      %p85 = por %p83, %p84
      %s87 = sadd.s32 %s86, 1
      %p90 = scmp.eq.s32.totalorder %s10, 1
      %p91 = scmp.ne.s32.totalorder %s86, %s88
      %p92 = scmp.eq.s32.totalorder %s10, 0
      %p93 = por %p91, %p92
      %p94 = scmp.ne.s32.totalorder %s86, %s88
      %p95 = scmp.eq.s32.totalorder %s15, 1
      %p96 = por %p94, %p95
      %p97 = scmp.ne.s32.totalorder %s88, %s89
      %p98 = scmp.eq.s32.totalorder %s15, 0
      %p99 = por %p97, %p98
      %p100 = scmp.ne.s32.totalorder %s88, %s89
      %p101 = scmp.eq.s32.totalorder %s16, 1
      %p102 = por %p100, %p101
      %p104 = scmp.ne.s32.totalorder %s89, %s103
      %p105 = scmp.eq.s32.totalorder %s16, 0
      %p106 = por %p104, %p105
      %p107 = scmp.le.s32.totalorder 1, %s10
      %p108 = scmp.lt.s32.totalorder %s10, 3
      %p109 = pnand %p107, %p108
      %p110 = pneg %p109
      // Predicated region
      $region9: #{tpu_custom_call.1} parent=5 // pred_check
        _
      $region10: #{tpu_custom_call.1} parent=5 // pred_check_branch
        %112 = sbr.rel (%p109) target = $region12
      $region11: #{tpu_custom_call.1} parent=5 // pred_region
        %s113 = ssub.s32 %s10, 1
        // Predicated region
        $region13: #{tpu_custom_call.1} parent=11 // pred_check
          %p114 = pneg %p57
        $region14: #{tpu_custom_call.1} parent=11 // pred_check_branch
          %116 = sbr.rel (%p114) target = $region16
        $region15: #{tpu_custom_call.1} parent=11 // pred_region
          _
        $region16: #{tpu_custom_call.1} parent=11 // pred_fallthru
          _
        // Predicated region
        $region17: #{tpu_custom_call.1} parent=11 // pred_check
          %p117 = pneg %p78
        $region18: #{tpu_custom_call.1} parent=11 // pred_check_branch
          %119 = sbr.rel (%p117) target = $region20
        $region19: #{tpu_custom_call.1} parent=11 // pred_region
          _
        $region20: #{tpu_custom_call.1} parent=11 // pred_fallthru
          _
      $region12: #{tpu_custom_call.1} parent=5 // pred_fallthru
        _
      %p120 = scmp.lt.s32.totalorder %s10, 2
      // Predicated region
      $region21: #{tpu_custom_call.1} parent=5 // pred_check
        %p121 = pneg %p120
      $region22: #{tpu_custom_call.1} parent=5 // pred_check_branch
        %123 = sbr.rel (%p121) target = $region24
      $region23: #{tpu_custom_call.1} parent=5 // pred_region
        // Predicated region
        $region25: #{tpu_custom_call.1} parent=23 // pred_check
          %p124 = pneg %p30
        $region26: #{tpu_custom_call.1} parent=23 // pred_check_branch
          %126 = sbr.rel (%p124) target = $region28
        $region27: #{tpu_custom_call.1} parent=23 // pred_region
          %s127 = sand.u32 %s20, 1
          %s128 = sand.u32 %s20, 1
          %s129 = smul.addr %s128, 32
          %s130 = scalar_lea.vmem [#allocation4], %s129
          %s131 = smul.addr %s10, 4
          %s132 = scalar_lea.vmem %s0, %s131
          // Predicated region
          $region29: #{tpu_custom_call.1} parent=27 // pred_check
            _
          $region30: #{tpu_custom_call.1} parent=27 // pred_check_branch
            %134 = sbr.rel (0) target = $region32
          $region31: #{tpu_custom_call.1} parent=27 // pred_region
            // Predicated region
            $region33: #{tpu_custom_call.1} parent=31 // pred_check
              _
            $region34: #{tpu_custom_call.1} parent=31 // pred_check_branch
              %136 = sbr.rel target = $region36
            $region35: #{tpu_custom_call.1} parent=31 // pred_region
              // Predicated region
              $region48: #{tpu_custom_call.1} parent=35 // pred_check
                _
              $region49: #{tpu_custom_call.1} parent=35 // pred_check_branch
                %165 = sbr.rel (0) target = $region51
              $region50: #{tpu_custom_call.1} parent=35 // pred_region
                loop: start=0, step=1, limit=1
                $region52: #{tpu_custom_call.1} parent=50 // loop_pre_header
                  _
                $region53: #{tpu_custom_call.1} parent=50 // loop_header
                  %s167 = sphi 0, %s171
                  %p168 = scmp.ge.s32.totalorder %s167, 1
                  %s172 = sphi %s132, %s132
                  %s173 = sphi %s130, %s130
                $region54: #{tpu_custom_call.1} parent=50 // loop_header_branch
                  %170 = sbr.rel (%p168) target = $region58
                $region55: #{tpu_custom_call.1} parent=50 // loop_body
                  _
                $region56: #{tpu_custom_call.1} parent=50 // loop_footer
                  %s171 = sadd.s32 1, %s167
                $region57: #{tpu_custom_call.1} parent=50 // loop_footer_branch
                  %166 = sbr.rel target = $region53
                $region58: #{tpu_custom_call.1} parent=50 // loop_exit
                  _
                loop: start=0, step=1, limit=1
                $region59: #{tpu_custom_call.1} parent=50 // loop_pre_header
                  _
                $region60: #{tpu_custom_call.1} parent=50 // loop_header
                  %s176 = sphi 0, %s180
                  %p177 = scmp.ge.s32.totalorder %s176, 1
                  %s181 = sphi %s132, %s132
                  %s182 = sphi %s130, %s130
                $region61: #{tpu_custom_call.1} parent=50 // loop_header_branch
                  %179 = sbr.rel (%p177) target = $region65
                $region62: #{tpu_custom_call.1} parent=50 // loop_body
                  %v183 = vld [vmem:[%s181] sm:$0xf]
                  %184 = vst [vmem:[%s182] sm:$0xf] %v183
                  %v185 = vld [vmem:[%s181 + $0x8] sm:$0xf]
                  %186 = vst [vmem:[%s182 + $0x4] sm:$0xf] %v185
                  %v187 = vld [vmem:[%s181 + $0x10] sm:$0xf]
                  %188 = vst [vmem:[%s182 + $0x8] sm:$0xf] %v187
                  %v189 = vld [vmem:[%s181 + $0x18] sm:$0xf]
                  %190 = vst [vmem:[%s182 + $0xc] sm:$0xf] %v189
                  %v191 = vld [vmem:[%s181 + $0x20] sm:$0xf]
                  %192 = vst [vmem:[%s182 + $0x10] sm:$0xf] %v191
                  %v193 = vld [vmem:[%s181 + $0x28] sm:$0xf]
                  %194 = vst [vmem:[%s182 + $0x14] sm:$0xf] %v193
                  %v195 = vld [vmem:[%s181 + $0x30] sm:$0xf]
                  %196 = vst [vmem:[%s182 + $0x18] sm:$0xf] %v195
                  %v197 = vld [vmem:[%s181 + $0x38] sm:$0xf]
                  %198 = vst [vmem:[%s182 + $0x1c] sm:$0xf] %v197
                $region63: #{tpu_custom_call.1} parent=50 // loop_footer
                  %s180 = sadd.s32 1, %s176
                $region64: #{tpu_custom_call.1} parent=50 // loop_footer_branch
                  %175 = sbr.rel target = $region60
                $region65: #{tpu_custom_call.1} parent=50 // loop_exit
                  _
              $region51: #{tpu_custom_call.1} parent=35 // pred_fallthru
                _
            $region36: #{tpu_custom_call.1} parent=31 // pred_fallthru
              _
            // Predicated region
            $region37: #{tpu_custom_call.1} parent=31 // pred_check
              _
            $region38: #{tpu_custom_call.1} parent=31 // pred_check_branch
              %138 = sbr.rel (0) target = $region40
            $region39: #{tpu_custom_call.1} parent=31 // pred_region
              loop: start=0, step=1, limit=1
              $region41: #{tpu_custom_call.1} parent=39 // loop_pre_header
                _
              $region42: #{tpu_custom_call.1} parent=39 // loop_header
                %s141 = sphi 0, %s145
                %p142 = scmp.ge.s32.totalorder %s141, 1
                %s146 = sphi %s132, %s132
                %s147 = sphi %s130, %s130
              $region43: #{tpu_custom_call.1} parent=39 // loop_header_branch
                %144 = sbr.rel (%p142) target = $region47
              $region44: #{tpu_custom_call.1} parent=39 // loop_body
                %v148 = vld [vmem:[%s146] sm:$0xf]
                %149 = vst [vmem:[%s147] sm:$0xf] %v148
                %v150 = vld [vmem:[%s146 + $0x8] sm:$0xf]
                %151 = vst [vmem:[%s147 + $0x4] sm:$0xf] %v150
                %v152 = vld [vmem:[%s146 + $0x10] sm:$0xf]
                %153 = vst [vmem:[%s147 + $0x8] sm:$0xf] %v152
                %v154 = vld [vmem:[%s146 + $0x18] sm:$0xf]
                %155 = vst [vmem:[%s147 + $0xc] sm:$0xf] %v154
                %v156 = vld [vmem:[%s146 + $0x20] sm:$0xf]
                %157 = vst [vmem:[%s147 + $0x10] sm:$0xf] %v156
                %v158 = vld [vmem:[%s146 + $0x28] sm:$0xf]
                %159 = vst [vmem:[%s147 + $0x14] sm:$0xf] %v158
                %v160 = vld [vmem:[%s146 + $0x30] sm:$0xf]
                %161 = vst [vmem:[%s147 + $0x18] sm:$0xf] %v160
                %v162 = vld [vmem:[%s146 + $0x38] sm:$0xf]
                %163 = vst [vmem:[%s147 + $0x1c] sm:$0xf] %v162
              $region45: #{tpu_custom_call.1} parent=39 // loop_footer
                %s145 = sadd.s32 1, %s141
              $region46: #{tpu_custom_call.1} parent=39 // loop_footer_branch
                %140 = sbr.rel target = $region42
              $region47: #{tpu_custom_call.1} parent=39 // loop_exit
                _
            $region40: #{tpu_custom_call.1} parent=31 // pred_fallthru
              _
          $region32: #{tpu_custom_call.1} parent=27 // pred_fallthru
            _
          %199 = vnop
        $region28: #{tpu_custom_call.1} parent=23 // pred_fallthru
          _
      $region24: #{tpu_custom_call.1} parent=5 // pred_fallthru
        _
      %p200 = scmp.le.s32.totalorder 1, %s10
      %p201 = scmp.lt.s32.totalorder %s10, 3
      %p202 = pnand %p200, %p201
      %p203 = pneg %p202
      // Predicated region
      $region66: #{tpu_custom_call.1} parent=5 // pred_check
        _
      $region67: #{tpu_custom_call.1} parent=5 // pred_check_branch
        %205 = sbr.rel (%p202) target = $region69
      $region68: #{tpu_custom_call.1} parent=5 // pred_region
        %s206 = ssub.s32 %s10, 1
        %s207 = sand.u32 %s23, 1
        %s208 = sand.u32 %s23, 1
        %s209 = smul.addr %s208, 32
        %s210 = scalar_lea.vmem [#allocation4], %s209
        // Predicated region
        $region70: #{tpu_custom_call.1} parent=68 // pred_check
          %p211 = pneg %p36
        $region71: #{tpu_custom_call.1} parent=68 // pred_check_branch
          %213 = sbr.rel (%p211) target = $region73
        $region72: #{tpu_custom_call.1} parent=68 // pred_region
          _
        $region73: #{tpu_custom_call.1} parent=68 // pred_fallthru
          _
        %s214 = sand.u32 %s23, 1
        %s215 = sand.u32 %s23, 1
        %s216 = smul.addr %s215, 32
        %s217 = scalar_lea.vmem [#allocation4], %s216
        %p218 = pneg %p36
        %p219 = pneg %p33
        %p220 = pneg %p57
        %p221 = pneg %p54
        %p222 = pneg %p78
        %p223 = pneg %p75
        %p224 = pneg %p99
        %p225 = pneg %p96
        %p226 = scmp.eq.s32.totalorder %s15, 0
        // Predicated region
        $region74: #{tpu_custom_call.1} parent=68 // pred_check
          %p227 = pneg %p226
        $region75: #{tpu_custom_call.1} parent=68 // pred_check_branch
          %229 = sbr.rel (%p227) target = $region77
        $region76: #{tpu_custom_call.1} parent=68 // pred_region
          %vm230 = vcmask 64512
          %231 = vst.msk [vmem:[#allocation2] sm:$0xff] %vm230, 0.0
          %232 = vst.msk [vmem:[#allocation2 + $0x8] sm:$0xff] %vm230, 0.0
          %233 = vst.msk [vmem:[#allocation2 + $0x10] sm:$0xff] %vm230, 0.0
          %234 = vst.msk [vmem:[#allocation2 + $0x18] sm:$0xff] %vm230, 0.0
          %235 = vst.msk [vmem:[#allocation3] sm:$0xff] %vm230, 0.0
          %236 = vst.msk [vmem:[#allocation3 + $0x8] sm:$0xff] %vm230, 0.0
          %237 = vst.msk [vmem:[#allocation3 + $0x10] sm:$0xff] %vm230, 0.0
          %238 = vst.msk [vmem:[#allocation3 + $0x18] sm:$0xff] %vm230, 0.0
        $region77: #{tpu_custom_call.1} parent=68 // pred_fallthru
          _
        %v239 = vld [vmem:[%s1] sm:$0xff]
        %v240 = vld [vmem:[%s1 + $0x8] sm:$0xff]
        %v241 = vld [vmem:[%s1 + $0x10] sm:$0xff]
        %v242 = vld [vmem:[%s1 + $0x18] sm:$0xff]
        %v243 = vld [vmem:[%s2] sm:$0xff]
        %v244 = vld [vmem:[%s2 + $0x8] sm:$0xff]
        %v245 = vld [vmem:[%s2 + $0x10] sm:$0xff]
        %v246 = vld [vmem:[%s2 + $0x18] sm:$0xff]
        %v247 = vld [vmem:[%s210] sm:$0x7]
        %249 = vset.pattern.permute.xlu0 0
        %250 = vperm.xlu0 %249, %v239
        %v251 = vpop.permute.xlu0 %250
        %254 = vset.pattern.permute.xlu0 0
        %255 = vperm.xlu0 %254, %v240
        %v256 = vpop.permute.xlu0 %255
        %259 = vset.pattern.permute.xlu0 0
        %260 = vperm.xlu0 %259, %v241
        %v261 = vpop.permute.xlu0 %260
        %264 = vset.pattern.permute.xlu0 0
        %265 = vperm.xlu0 %264, %v242
        %v266 = vpop.permute.xlu0 %265
        %v268 = vlaneseq
        %v269 = vshrl.u32 %v268, 7
        %v270 = vsub.s32 0, %v269
        %v271 = vrot.slane %v247, %v270
        %v272 = vmul.f32 %v251, %v271
        %v273 = vmul.f32 %v256, %v271
        %v274 = vmul.f32 %v261, %v271
        %v275 = vmul.f32 %v266, %v271
        %276 = vset.pattern.permute.xlu0 1
        %277 = vperm.xlu0 %276, %v239
        %v278 = vpop.permute.xlu0 %277
        %280 = vset.pattern.permute.xlu0 1
        %281 = vperm.xlu0 %280, %v240
        %v282 = vpop.permute.xlu0 %281
        %284 = vset.pattern.permute.xlu0 1
        %285 = vperm.xlu0 %284, %v241
        %v286 = vpop.permute.xlu0 %285
        %288 = vset.pattern.permute.xlu0 1
        %289 = vperm.xlu0 %288, %v242
        %v290 = vpop.permute.xlu0 %289
        %v292 = vlaneseq
        %v293 = vshrl.u32 %v292, 7
        %v294 = vsub.s32 1, %v293
        %v295 = vrot.slane %v247, %v294
        %v296 = vmul.f32 %v278, %v295
        %v297 = vmul.f32 %v282, %v295
        %v298 = vmul.f32 %v286, %v295
        %v299 = vmul.f32 %v290, %v295
        %v300 = vadd.f32 %v272, %v296
        %v301 = vadd.f32 %v273, %v297
        %v302 = vadd.f32 %v274, %v298
        %v303 = vadd.f32 %v275, %v299
        %304 = vset.pattern.permute.xlu0 2
        %305 = vperm.xlu0 %304, %v239
        %v306 = vpop.permute.xlu0 %305
        %308 = vset.pattern.permute.xlu0 2
        %309 = vperm.xlu0 %308, %v240
        %v310 = vpop.permute.xlu0 %309
        %312 = vset.pattern.permute.xlu0 2
        %313 = vperm.xlu0 %312, %v241
        %v314 = vpop.permute.xlu0 %313
        %316 = vset.pattern.permute.xlu0 2
        %317 = vperm.xlu0 %316, %v242
        %v318 = vpop.permute.xlu0 %317
        %v320 = vlaneseq
        %v321 = vshrl.u32 %v320, 7
        %v322 = vsub.s32 2, %v321
        %v323 = vrot.slane %v247, %v322
        %v324 = vmul.f32 %v306, %v323
        %v325 = vmul.f32 %v310, %v323
        %v326 = vmul.f32 %v314, %v323
        %v327 = vmul.f32 %v318, %v323
        %v328 = vadd.f32 %v300, %v324
        %v329 = vadd.f32 %v301, %v325
        %v330 = vadd.f32 %v302, %v326
        %v331 = vadd.f32 %v303, %v327
        %333 = vset.pattern.permute.xlu0 0
        %334 = vperm.xlu0 %333, %v243
        %v335 = vpop.permute.xlu0 %334
        %338 = vset.pattern.permute.xlu0 0
        %339 = vperm.xlu0 %338, %v244
        %v340 = vpop.permute.xlu0 %339
        %343 = vset.pattern.permute.xlu0 0
        %344 = vperm.xlu0 %343, %v245
        %v345 = vpop.permute.xlu0 %344
        %348 = vset.pattern.permute.xlu0 0
        %349 = vperm.xlu0 %348, %v246
        %v350 = vpop.permute.xlu0 %349
        %v352 = vadd.f32 %v328, %v335
        %v353 = vadd.f32 %v329, %v340
        %v354 = vadd.f32 %v330, %v345
        %v355 = vadd.f32 %v331, %v350
        %v356 = vmax.f32 %v352, 0.0
        %v357 = vmax.f32 %v353, 0.0
        %v358 = vmax.f32 %v354, 0.0
        %v359 = vmax.f32 %v355, 0.0
        %360 = vadd.xlane.f32.xlu0 %v356
        %v361 = vpop.xlane.xlu0 %360
        %362 = vadd.xlane.f32.xlu0 %v357
        %v363 = vpop.xlane.xlu0 %362
        %364 = vadd.xlane.f32.xlu0 %v358
        %v365 = vpop.xlane.xlu0 %364
        %366 = vadd.xlane.f32.xlu0 %v359
        %v367 = vpop.xlane.xlu0 %366
        %v368 = vadd.f32 %v361, 0.0
        %v369 = vadd.f32 %v363, 0.0
        %v370 = vadd.f32 %v365, 0.0
        %v371 = vadd.f32 %v367, 0.0
        %372 = vmax.xlane.f32.xlu0 %v356
        %v373 = vpop.xlane.xlu0 %372
        %374 = vmax.xlane.f32.xlu0 %v357
        %v375 = vpop.xlane.xlu0 %374
        %376 = vmax.xlane.f32.xlu0 %v358
        %v377 = vpop.xlane.xlu0 %376
        %378 = vmax.xlane.f32.xlu0 %v359
        %v379 = vpop.xlane.xlu0 %378
        %v380 = vmax.f32 %v373, 0.0
        %v381 = vmax.f32 %v375, 0.0
        %v382 = vmax.f32 %v377, 0.0
        %v383 = vmax.f32 %v379, 0.0
        %v384 = vld [vmem:[#allocation2] sm:$0xff]
        %v385 = vld [vmem:[#allocation2 + $0x8] sm:$0xff]
        %v386 = vld [vmem:[#allocation2 + $0x10] sm:$0xff]
        %v387 = vld [vmem:[#allocation2 + $0x18] sm:$0xff]
        %v388 = vadd.f32 %v384, %v368
        %v389 = vadd.f32 %v385, %v369
        %v390 = vadd.f32 %v386, %v370
        %v391 = vadd.f32 %v387, %v371
        %vm392 = vcmask 7168
        %393 = vst.msk [vmem:[#allocation2] sm:$0xff] %vm392, %v388
        %394 = vst.msk [vmem:[#allocation2 + $0x8] sm:$0xff] %vm392, %v389
        %395 = vst.msk [vmem:[#allocation2 + $0x10] sm:$0xff] %vm392, %v390
        %396 = vst.msk [vmem:[#allocation2 + $0x18] sm:$0xff] %vm392, %v391
        %v397 = vld [vmem:[#allocation3] sm:$0xff]
        %v398 = vld [vmem:[#allocation3 + $0x8] sm:$0xff]
        %v399 = vld [vmem:[#allocation3 + $0x10] sm:$0xff]
        %v400 = vld [vmem:[#allocation3 + $0x18] sm:$0xff]
        %v401 = vmax.f32 %v397, %v380
        %v402 = vmax.f32 %v398, %v381
        %v403 = vmax.f32 %v399, %v382
        %v404 = vmax.f32 %v400, %v383
        %405 = vst.msk [vmem:[#allocation3] sm:$0xff] %vm392, %v401
        %406 = vst.msk [vmem:[#allocation3 + $0x8] sm:$0xff] %vm392, %v402
        %407 = vst.msk [vmem:[#allocation3 + $0x10] sm:$0xff] %vm392, %v403
        %408 = vst.msk [vmem:[#allocation3 + $0x18] sm:$0xff] %vm392, %v404
        %s409 = scalar_lea.vmem %s210, 4 [#allocation4]
        %v410 = vld [vmem:[%s409] sm:$0x7]
        %v411 = vlaneseq
        %v412 = vshrl.u32 %v411, 7
        %v413 = vsub.s32 0, %v412
        %v414 = vrot.slane %v410, %v413
        %v415 = vmul.f32 %v251, %v414
        %v416 = vmul.f32 %v256, %v414
        %v417 = vmul.f32 %v261, %v414
        %v418 = vmul.f32 %v266, %v414
        %v419 = vlaneseq
        %v420 = vshrl.u32 %v419, 7
        %v421 = vsub.s32 1, %v420
        %v422 = vrot.slane %v410, %v421
        %v423 = vmul.f32 %v278, %v422
        %v424 = vmul.f32 %v282, %v422
        %v425 = vmul.f32 %v286, %v422
        %v426 = vmul.f32 %v290, %v422
        %v427 = vadd.f32 %v415, %v423
        %v428 = vadd.f32 %v416, %v424
        %v429 = vadd.f32 %v417, %v425
        %v430 = vadd.f32 %v418, %v426
        %v431 = vlaneseq
        %v432 = vshrl.u32 %v431, 7
        %v433 = vsub.s32 2, %v432
        %v434 = vrot.slane %v410, %v433
        %v435 = vmul.f32 %v306, %v434
        %v436 = vmul.f32 %v310, %v434
        %v437 = vmul.f32 %v314, %v434
        %v438 = vmul.f32 %v318, %v434
        %v439 = vadd.f32 %v427, %v435
        %v440 = vadd.f32 %v428, %v436
        %v441 = vadd.f32 %v429, %v437
        %v442 = vadd.f32 %v430, %v438
        %v443 = vadd.f32 %v439, %v335
        %v444 = vadd.f32 %v440, %v340
        %v445 = vadd.f32 %v441, %v345
        %v446 = vadd.f32 %v442, %v350
        %v447 = vmax.f32 %v443, 0.0
        %v448 = vmax.f32 %v444, 0.0
        %v449 = vmax.f32 %v445, 0.0
        %v450 = vmax.f32 %v446, 0.0
        %451 = vadd.xlane.f32.xlu0 %v447
        %v452 = vpop.xlane.xlu0 %451
        %453 = vadd.xlane.f32.xlu0 %v448
        %v454 = vpop.xlane.xlu0 %453
        %455 = vadd.xlane.f32.xlu0 %v449
        %v456 = vpop.xlane.xlu0 %455
        %457 = vadd.xlane.f32.xlu0 %v450
        %v458 = vpop.xlane.xlu0 %457
        %v459 = vadd.f32 %v452, 0.0
        %v460 = vadd.f32 %v454, 0.0
        %v461 = vadd.f32 %v456, 0.0
        %v462 = vadd.f32 %v458, 0.0
        %463 = vmax.xlane.f32.xlu0 %v447
        %v464 = vpop.xlane.xlu0 %463
        %465 = vmax.xlane.f32.xlu0 %v448
        %v466 = vpop.xlane.xlu0 %465
        %467 = vmax.xlane.f32.xlu0 %v449
        %v468 = vpop.xlane.xlu0 %467
        %469 = vmax.xlane.f32.xlu0 %v450
        %v470 = vpop.xlane.xlu0 %469
        %v471 = vmax.f32 %v464, 0.0
        %v472 = vmax.f32 %v466, 0.0
        %v473 = vmax.f32 %v468, 0.0
        %v474 = vmax.f32 %v470, 0.0
        %v475 = vld [vmem:[#allocation2] sm:$0xff]
        %v476 = vld [vmem:[#allocation2 + $0x8] sm:$0xff]
        %v477 = vld [vmem:[#allocation2 + $0x10] sm:$0xff]
        %v478 = vld [vmem:[#allocation2 + $0x18] sm:$0xff]
        %v479 = vadd.f32 %v475, %v459
        %v480 = vadd.f32 %v476, %v460
        %v481 = vadd.f32 %v477, %v461
        %v482 = vadd.f32 %v478, %v462
        %vm483 = vcmask 15368
        %484 = vst.msk [vmem:[#allocation2] sm:$0xff] %vm483, %v479
        %485 = vst.msk [vmem:[#allocation2 + $0x8] sm:$0xff] %vm483, %v480
        %486 = vst.msk [vmem:[#allocation2 + $0x10] sm:$0xff] %vm483, %v481
        %487 = vst.msk [vmem:[#allocation2 + $0x18] sm:$0xff] %vm483, %v482
        %v488 = vld [vmem:[#allocation3] sm:$0xff]
        %v489 = vld [vmem:[#allocation3 + $0x8] sm:$0xff]
        %v490 = vld [vmem:[#allocation3 + $0x10] sm:$0xff]
        %v491 = vld [vmem:[#allocation3 + $0x18] sm:$0xff]
        %v492 = vmax.f32 %v488, %v471
        %v493 = vmax.f32 %v489, %v472
        %v494 = vmax.f32 %v490, %v473
        %v495 = vmax.f32 %v491, %v474
        %496 = vst.msk [vmem:[#allocation3] sm:$0xff] %vm483, %v492
        %497 = vst.msk [vmem:[#allocation3 + $0x8] sm:$0xff] %vm483, %v493
        %498 = vst.msk [vmem:[#allocation3 + $0x10] sm:$0xff] %vm483, %v494
        %499 = vst.msk [vmem:[#allocation3 + $0x18] sm:$0xff] %vm483, %v495
        %s500 = scalar_lea.vmem %s210, 8 [#allocation4]
        %v501 = vld [vmem:[%s500] sm:$0x7]
        %v502 = vlaneseq
        %v503 = vshrl.u32 %v502, 7
        %v504 = vsub.s32 0, %v503
        %v505 = vrot.slane %v501, %v504
        %v506 = vmul.f32 %v251, %v505
        %v507 = vmul.f32 %v256, %v505
        %v508 = vmul.f32 %v261, %v505
        %v509 = vmul.f32 %v266, %v505
        %v510 = vlaneseq
        %v511 = vshrl.u32 %v510, 7
        %v512 = vsub.s32 1, %v511
        %v513 = vrot.slane %v501, %v512
        %v514 = vmul.f32 %v278, %v513
        %v515 = vmul.f32 %v282, %v513
        %v516 = vmul.f32 %v286, %v513
        %v517 = vmul.f32 %v290, %v513
        %v518 = vadd.f32 %v506, %v514
        %v519 = vadd.f32 %v507, %v515
        %v520 = vadd.f32 %v508, %v516
        %v521 = vadd.f32 %v509, %v517
        %v522 = vlaneseq
        %v523 = vshrl.u32 %v522, 7
        %v524 = vsub.s32 2, %v523
        %v525 = vrot.slane %v501, %v524
        %v526 = vmul.f32 %v306, %v525
        %v527 = vmul.f32 %v310, %v525
        %v528 = vmul.f32 %v314, %v525
        %v529 = vmul.f32 %v318, %v525
        %v530 = vadd.f32 %v518, %v526
        %v531 = vadd.f32 %v519, %v527
        %v532 = vadd.f32 %v520, %v528
        %v533 = vadd.f32 %v521, %v529
        %v534 = vadd.f32 %v530, %v335
        %v535 = vadd.f32 %v531, %v340
        %v536 = vadd.f32 %v532, %v345
        %v537 = vadd.f32 %v533, %v350
        %v538 = vmax.f32 %v534, 0.0
        %v539 = vmax.f32 %v535, 0.0
        %v540 = vmax.f32 %v536, 0.0
        %v541 = vmax.f32 %v537, 0.0
        %542 = vadd.xlane.f32.xlu0 %v538
        %v543 = vpop.xlane.xlu0 %542
        %544 = vadd.xlane.f32.xlu0 %v539
        %v545 = vpop.xlane.xlu0 %544
        %546 = vadd.xlane.f32.xlu0 %v540
        %v547 = vpop.xlane.xlu0 %546
        %548 = vadd.xlane.f32.xlu0 %v541
        %v549 = vpop.xlane.xlu0 %548
        %v550 = vadd.f32 %v543, 0.0
        %v551 = vadd.f32 %v545, 0.0
        %v552 = vadd.f32 %v547, 0.0
        %v553 = vadd.f32 %v549, 0.0
        %554 = vmax.xlane.f32.xlu0 %v538
        %v555 = vpop.xlane.xlu0 %554
        %556 = vmax.xlane.f32.xlu0 %v539
        %v557 = vpop.xlane.xlu0 %556
        %558 = vmax.xlane.f32.xlu0 %v540
        %v559 = vpop.xlane.xlu0 %558
        %560 = vmax.xlane.f32.xlu0 %v541
        %v561 = vpop.xlane.xlu0 %560
        %v562 = vmax.f32 %v555, 0.0
        %v563 = vmax.f32 %v557, 0.0
        %v564 = vmax.f32 %v559, 0.0
        %v565 = vmax.f32 %v561, 0.0
        %v566 = vld [vmem:[#allocation2] sm:$0xff]
        %v567 = vld [vmem:[#allocation2 + $0x8] sm:$0xff]
        %v568 = vld [vmem:[#allocation2 + $0x10] sm:$0xff]
        %v569 = vld [vmem:[#allocation2 + $0x18] sm:$0xff]
        %v570 = vadd.f32 %v566, %v550
        %v571 = vadd.f32 %v567, %v551
        %v572 = vadd.f32 %v568, %v552
        %v573 = vadd.f32 %v569, %v553
        %vm574 = vcmask 23568
        %575 = vst.msk [vmem:[#allocation2] sm:$0xff] %vm574, %v570
        %576 = vst.msk [vmem:[#allocation2 + $0x8] sm:$0xff] %vm574, %v571
        %577 = vst.msk [vmem:[#allocation2 + $0x10] sm:$0xff] %vm574, %v572
        %578 = vst.msk [vmem:[#allocation2 + $0x18] sm:$0xff] %vm574, %v573
        %v579 = vld [vmem:[#allocation3] sm:$0xff]
        %v580 = vld [vmem:[#allocation3 + $0x8] sm:$0xff]
        %v581 = vld [vmem:[#allocation3 + $0x10] sm:$0xff]
        %v582 = vld [vmem:[#allocation3 + $0x18] sm:$0xff]
        %v583 = vmax.f32 %v579, %v562
        %v584 = vmax.f32 %v580, %v563
        %v585 = vmax.f32 %v581, %v564
        %v586 = vmax.f32 %v582, %v565
        %587 = vst.msk [vmem:[#allocation3] sm:$0xff] %vm574, %v583
        %588 = vst.msk [vmem:[#allocation3 + $0x8] sm:$0xff] %vm574, %v584
        %589 = vst.msk [vmem:[#allocation3 + $0x10] sm:$0xff] %vm574, %v585
        %590 = vst.msk [vmem:[#allocation3 + $0x18] sm:$0xff] %vm574, %v586
        %s591 = scalar_lea.vmem %s210, 12 [#allocation4]
        %v592 = vld [vmem:[%s591] sm:$0x7]
        %v593 = vlaneseq
        %v594 = vshrl.u32 %v593, 7
        %v595 = vsub.s32 0, %v594
        %v596 = vrot.slane %v592, %v595
        %v597 = vmul.f32 %v251, %v596
        %v598 = vmul.f32 %v256, %v596
        %v599 = vmul.f32 %v261, %v596
        %v600 = vmul.f32 %v266, %v596
        %v601 = vlaneseq
        %v602 = vshrl.u32 %v601, 7
        %v603 = vsub.s32 1, %v602
        %v604 = vrot.slane %v592, %v603
        %v605 = vmul.f32 %v278, %v604
        %v606 = vmul.f32 %v282, %v604
        %v607 = vmul.f32 %v286, %v604
        %v608 = vmul.f32 %v290, %v604
        %v609 = vadd.f32 %v597, %v605
        %v610 = vadd.f32 %v598, %v606
        %v611 = vadd.f32 %v599, %v607
        %v612 = vadd.f32 %v600, %v608
        %v613 = vlaneseq
        %v614 = vshrl.u32 %v613, 7
        %v615 = vsub.s32 2, %v614
        %v616 = vrot.slane %v592, %v615
        %v617 = vmul.f32 %v306, %v616
        %v618 = vmul.f32 %v310, %v616
        %v619 = vmul.f32 %v314, %v616
        %v620 = vmul.f32 %v318, %v616
        %v621 = vadd.f32 %v609, %v617
        %v622 = vadd.f32 %v610, %v618
        %v623 = vadd.f32 %v611, %v619
        %v624 = vadd.f32 %v612, %v620
        %v625 = vadd.f32 %v621, %v335
        %v626 = vadd.f32 %v622, %v340
        %v627 = vadd.f32 %v623, %v345
        %v628 = vadd.f32 %v624, %v350
        %v629 = vmax.f32 %v625, 0.0
        %v630 = vmax.f32 %v626, 0.0
        %v631 = vmax.f32 %v627, 0.0
        %v632 = vmax.f32 %v628, 0.0
        %633 = vadd.xlane.f32.xlu0 %v629
        %v634 = vpop.xlane.xlu0 %633
        %635 = vadd.xlane.f32.xlu0 %v630
        %v636 = vpop.xlane.xlu0 %635
        %637 = vadd.xlane.f32.xlu0 %v631
        %v638 = vpop.xlane.xlu0 %637
        %639 = vadd.xlane.f32.xlu0 %v632
        %v640 = vpop.xlane.xlu0 %639
        %v641 = vadd.f32 %v634, 0.0
        %v642 = vadd.f32 %v636, 0.0
        %v643 = vadd.f32 %v638, 0.0
        %v644 = vadd.f32 %v640, 0.0
        %645 = vmax.xlane.f32.xlu0 %v629
        %v646 = vpop.xlane.xlu0 %645
        %647 = vmax.xlane.f32.xlu0 %v630
        %v648 = vpop.xlane.xlu0 %647
        %649 = vmax.xlane.f32.xlu0 %v631
        %v650 = vpop.xlane.xlu0 %649
        %651 = vmax.xlane.f32.xlu0 %v632
        %v652 = vpop.xlane.xlu0 %651
        %v653 = vmax.f32 %v646, 0.0
        %v654 = vmax.f32 %v648, 0.0
        %v655 = vmax.f32 %v650, 0.0
        %v656 = vmax.f32 %v652, 0.0
        %v657 = vld [vmem:[#allocation2] sm:$0xff]
        %v658 = vld [vmem:[#allocation2 + $0x8] sm:$0xff]
        %v659 = vld [vmem:[#allocation2 + $0x10] sm:$0xff]
        %v660 = vld [vmem:[#allocation2 + $0x18] sm:$0xff]
        %v661 = vadd.f32 %v657, %v641
        %v662 = vadd.f32 %v658, %v642
        %v663 = vadd.f32 %v659, %v643
        %v664 = vadd.f32 %v660, %v644
        %vm665 = vcmask 31768
        %666 = vst.msk [vmem:[#allocation2] sm:$0xff] %vm665, %v661
        %667 = vst.msk [vmem:[#allocation2 + $0x8] sm:$0xff] %vm665, %v662
        %668 = vst.msk [vmem:[#allocation2 + $0x10] sm:$0xff] %vm665, %v663
        %669 = vst.msk [vmem:[#allocation2 + $0x18] sm:$0xff] %vm665, %v664
        %v670 = vld [vmem:[#allocation3] sm:$0xff]
        %v671 = vld [vmem:[#allocation3 + $0x8] sm:$0xff]
        %v672 = vld [vmem:[#allocation3 + $0x10] sm:$0xff]
        %v673 = vld [vmem:[#allocation3 + $0x18] sm:$0xff]
        %v674 = vmax.f32 %v670, %v653
        %v675 = vmax.f32 %v671, %v654
        %v676 = vmax.f32 %v672, %v655
        %v677 = vmax.f32 %v673, %v656
        %678 = vst.msk [vmem:[#allocation3] sm:$0xff] %vm665, %v674
        %679 = vst.msk [vmem:[#allocation3 + $0x8] sm:$0xff] %vm665, %v675
        %680 = vst.msk [vmem:[#allocation3 + $0x10] sm:$0xff] %vm665, %v676
        %681 = vst.msk [vmem:[#allocation3 + $0x18] sm:$0xff] %vm665, %v677
        %s682 = scalar_lea.vmem %s210, 16 [#allocation4]
        %v683 = vld [vmem:[%s682] sm:$0x7]
        %v684 = vlaneseq
        %v685 = vshrl.u32 %v684, 7
        %v686 = vsub.s32 0, %v685
        %v687 = vrot.slane %v683, %v686
        %v688 = vmul.f32 %v251, %v687
        %v689 = vmul.f32 %v256, %v687
        %v690 = vmul.f32 %v261, %v687
        %v691 = vmul.f32 %v266, %v687
        %v692 = vlaneseq
        %v693 = vshrl.u32 %v692, 7
        %v694 = vsub.s32 1, %v693
        %v695 = vrot.slane %v683, %v694
        %v696 = vmul.f32 %v278, %v695
        %v697 = vmul.f32 %v282, %v695
        %v698 = vmul.f32 %v286, %v695
        %v699 = vmul.f32 %v290, %v695
        %v700 = vadd.f32 %v688, %v696
        %v701 = vadd.f32 %v689, %v697
        %v702 = vadd.f32 %v690, %v698
        %v703 = vadd.f32 %v691, %v699
        %v704 = vlaneseq
        %v705 = vshrl.u32 %v704, 7
        %v706 = vsub.s32 2, %v705
        %v707 = vrot.slane %v683, %v706
        %v708 = vmul.f32 %v306, %v707
        %v709 = vmul.f32 %v310, %v707
        %v710 = vmul.f32 %v314, %v707
        %v711 = vmul.f32 %v318, %v707
        %v712 = vadd.f32 %v700, %v708
        %v713 = vadd.f32 %v701, %v709
        %v714 = vadd.f32 %v702, %v710
        %v715 = vadd.f32 %v703, %v711
        %v716 = vadd.f32 %v712, %v335
        %v717 = vadd.f32 %v713, %v340
        %v718 = vadd.f32 %v714, %v345
        %v719 = vadd.f32 %v715, %v350
        %v720 = vmax.f32 %v716, 0.0
        %v721 = vmax.f32 %v717, 0.0
        %v722 = vmax.f32 %v718, 0.0
        %v723 = vmax.f32 %v719, 0.0
        %724 = vadd.xlane.f32.xlu0 %v720
        %v725 = vpop.xlane.xlu0 %724
        %726 = vadd.xlane.f32.xlu0 %v721
        %v727 = vpop.xlane.xlu0 %726
        %728 = vadd.xlane.f32.xlu0 %v722
        %v729 = vpop.xlane.xlu0 %728
        %730 = vadd.xlane.f32.xlu0 %v723
        %v731 = vpop.xlane.xlu0 %730
        %v732 = vadd.f32 %v725, 0.0
        %v733 = vadd.f32 %v727, 0.0
        %v734 = vadd.f32 %v729, 0.0
        %v735 = vadd.f32 %v731, 0.0
        %736 = vmax.xlane.f32.xlu0 %v720
        %v737 = vpop.xlane.xlu0 %736
        %738 = vmax.xlane.f32.xlu0 %v721
        %v739 = vpop.xlane.xlu0 %738
        %740 = vmax.xlane.f32.xlu0 %v722
        %v741 = vpop.xlane.xlu0 %740
        %742 = vmax.xlane.f32.xlu0 %v723
        %v743 = vpop.xlane.xlu0 %742
        %v744 = vmax.f32 %v737, 0.0
        %v745 = vmax.f32 %v739, 0.0
        %v746 = vmax.f32 %v741, 0.0
        %v747 = vmax.f32 %v743, 0.0
        %v748 = vld [vmem:[#allocation2] sm:$0xff]
        %v749 = vld [vmem:[#allocation2 + $0x8] sm:$0xff]
        %v750 = vld [vmem:[#allocation2 + $0x10] sm:$0xff]
        %v751 = vld [vmem:[#allocation2 + $0x18] sm:$0xff]
        %v752 = vadd.f32 %v748, %v732
        %v753 = vadd.f32 %v749, %v733
        %v754 = vadd.f32 %v750, %v734
        %v755 = vadd.f32 %v751, %v735
        %vm756 = vcmask 39968
        %757 = vst.msk [vmem:[#allocation2] sm:$0xff] %vm756, %v752
        %758 = vst.msk [vmem:[#allocation2 + $0x8] sm:$0xff] %vm756, %v753
        %759 = vst.msk [vmem:[#allocation2 + $0x10] sm:$0xff] %vm756, %v754
        %760 = vst.msk [vmem:[#allocation2 + $0x18] sm:$0xff] %vm756, %v755
        %v761 = vld [vmem:[#allocation3] sm:$0xff]
        %v762 = vld [vmem:[#allocation3 + $0x8] sm:$0xff]
        %v763 = vld [vmem:[#allocation3 + $0x10] sm:$0xff]
        %v764 = vld [vmem:[#allocation3 + $0x18] sm:$0xff]
        %v765 = vmax.f32 %v761, %v744
        %v766 = vmax.f32 %v762, %v745
        %v767 = vmax.f32 %v763, %v746
        %v768 = vmax.f32 %v764, %v747
        %769 = vst.msk [vmem:[#allocation3] sm:$0xff] %vm756, %v765
        %770 = vst.msk [vmem:[#allocation3 + $0x8] sm:$0xff] %vm756, %v766
        %771 = vst.msk [vmem:[#allocation3 + $0x10] sm:$0xff] %vm756, %v767
        %772 = vst.msk [vmem:[#allocation3 + $0x18] sm:$0xff] %vm756, %v768
        %s773 = scalar_lea.vmem %s210, 20 [#allocation4]
        %v774 = vld [vmem:[%s773] sm:$0x7]
        %v775 = vlaneseq
        %v776 = vshrl.u32 %v775, 7
        %v777 = vsub.s32 0, %v776
        %v778 = vrot.slane %v774, %v777
        %v779 = vmul.f32 %v251, %v778
        %v780 = vmul.f32 %v256, %v778
        %v781 = vmul.f32 %v261, %v778
        %v782 = vmul.f32 %v266, %v778
        %v783 = vlaneseq
        %v784 = vshrl.u32 %v783, 7
        %v785 = vsub.s32 1, %v784
        %v786 = vrot.slane %v774, %v785
        %v787 = vmul.f32 %v278, %v786
        %v788 = vmul.f32 %v282, %v786
        %v789 = vmul.f32 %v286, %v786
        %v790 = vmul.f32 %v290, %v786
        %v791 = vadd.f32 %v779, %v787
        %v792 = vadd.f32 %v780, %v788
        %v793 = vadd.f32 %v781, %v789
        %v794 = vadd.f32 %v782, %v790
        %v795 = vlaneseq
        %v796 = vshrl.u32 %v795, 7
        %v797 = vsub.s32 2, %v796
        %v798 = vrot.slane %v774, %v797
        %v799 = vmul.f32 %v306, %v798
        %v800 = vmul.f32 %v310, %v798
        %v801 = vmul.f32 %v314, %v798
        %v802 = vmul.f32 %v318, %v798
        %v803 = vadd.f32 %v791, %v799
        %v804 = vadd.f32 %v792, %v800
        %v805 = vadd.f32 %v793, %v801
        %v806 = vadd.f32 %v794, %v802
        %v807 = vadd.f32 %v803, %v335
        %v808 = vadd.f32 %v804, %v340
        %v809 = vadd.f32 %v805, %v345
        %v810 = vadd.f32 %v806, %v350
        %v811 = vmax.f32 %v807, 0.0
        %v812 = vmax.f32 %v808, 0.0
        %v813 = vmax.f32 %v809, 0.0
        %v814 = vmax.f32 %v810, 0.0
        %815 = vadd.xlane.f32.xlu0 %v811
        %v816 = vpop.xlane.xlu0 %815
        %817 = vadd.xlane.f32.xlu0 %v812
        %v818 = vpop.xlane.xlu0 %817
        %819 = vadd.xlane.f32.xlu0 %v813
        %v820 = vpop.xlane.xlu0 %819
        %821 = vadd.xlane.f32.xlu0 %v814
        %v822 = vpop.xlane.xlu0 %821
        %v823 = vadd.f32 %v816, 0.0
        %v824 = vadd.f32 %v818, 0.0
        %v825 = vadd.f32 %v820, 0.0
        %v826 = vadd.f32 %v822, 0.0
        %827 = vmax.xlane.f32.xlu0 %v811
        %v828 = vpop.xlane.xlu0 %827
        %829 = vmax.xlane.f32.xlu0 %v812
        %v830 = vpop.xlane.xlu0 %829
        %831 = vmax.xlane.f32.xlu0 %v813
        %v832 = vpop.xlane.xlu0 %831
        %833 = vmax.xlane.f32.xlu0 %v814
        %v834 = vpop.xlane.xlu0 %833
        %v835 = vmax.f32 %v828, 0.0
        %v836 = vmax.f32 %v830, 0.0
        %v837 = vmax.f32 %v832, 0.0
        %v838 = vmax.f32 %v834, 0.0
        %v839 = vld [vmem:[#allocation2] sm:$0xff]
        %v840 = vld [vmem:[#allocation2 + $0x8] sm:$0xff]
        %v841 = vld [vmem:[#allocation2 + $0x10] sm:$0xff]
        %v842 = vld [vmem:[#allocation2 + $0x18] sm:$0xff]
        %v843 = vadd.f32 %v839, %v823
        %v844 = vadd.f32 %v840, %v824
        %v845 = vadd.f32 %v841, %v825
        %v846 = vadd.f32 %v842, %v826
        %vm847 = vcmask 48168
        %848 = vst.msk [vmem:[#allocation2] sm:$0xff] %vm847, %v843
        %849 = vst.msk [vmem:[#allocation2 + $0x8] sm:$0xff] %vm847, %v844
        %850 = vst.msk [vmem:[#allocation2 + $0x10] sm:$0xff] %vm847, %v845
        %851 = vst.msk [vmem:[#allocation2 + $0x18] sm:$0xff] %vm847, %v846
        %v852 = vld [vmem:[#allocation3] sm:$0xff]
        %v853 = vld [vmem:[#allocation3 + $0x8] sm:$0xff]
        %v854 = vld [vmem:[#allocation3 + $0x10] sm:$0xff]
        %v855 = vld [vmem:[#allocation3 + $0x18] sm:$0xff]
        %v856 = vmax.f32 %v852, %v835
        %v857 = vmax.f32 %v853, %v836
        %v858 = vmax.f32 %v854, %v837
        %v859 = vmax.f32 %v855, %v838
        %860 = vst.msk [vmem:[#allocation3] sm:$0xff] %vm847, %v856
        %861 = vst.msk [vmem:[#allocation3 + $0x8] sm:$0xff] %vm847, %v857
        %862 = vst.msk [vmem:[#allocation3 + $0x10] sm:$0xff] %vm847, %v858
        %863 = vst.msk [vmem:[#allocation3 + $0x18] sm:$0xff] %vm847, %v859
        %s864 = scalar_lea.vmem %s210, 24 [#allocation4]
        %v865 = vld [vmem:[%s864] sm:$0x7]
        %v866 = vlaneseq
        %v867 = vshrl.u32 %v866, 7
        %v868 = vsub.s32 0, %v867
        %v869 = vrot.slane %v865, %v868
        %v870 = vmul.f32 %v251, %v869
        %v871 = vmul.f32 %v256, %v869
        %v872 = vmul.f32 %v261, %v869
        %v873 = vmul.f32 %v266, %v869
        %v874 = vlaneseq
        %v875 = vshrl.u32 %v874, 7
        %v876 = vsub.s32 1, %v875
        %v877 = vrot.slane %v865, %v876
        %v878 = vmul.f32 %v278, %v877
        %v879 = vmul.f32 %v282, %v877
        %v880 = vmul.f32 %v286, %v877
        %v881 = vmul.f32 %v290, %v877
        %v882 = vadd.f32 %v870, %v878
        %v883 = vadd.f32 %v871, %v879
        %v884 = vadd.f32 %v872, %v880
        %v885 = vadd.f32 %v873, %v881
        %v886 = vlaneseq
        %v887 = vshrl.u32 %v886, 7
        %v888 = vsub.s32 2, %v887
        %v889 = vrot.slane %v865, %v888
        %v890 = vmul.f32 %v306, %v889
        %v891 = vmul.f32 %v310, %v889
        %v892 = vmul.f32 %v314, %v889
        %v893 = vmul.f32 %v318, %v889
        %v894 = vadd.f32 %v882, %v890
        %v895 = vadd.f32 %v883, %v891
        %v896 = vadd.f32 %v884, %v892
        %v897 = vadd.f32 %v885, %v893
        %v898 = vadd.f32 %v894, %v335
        %v899 = vadd.f32 %v895, %v340
        %v900 = vadd.f32 %v896, %v345
        %v901 = vadd.f32 %v897, %v350
        %v902 = vmax.f32 %v898, 0.0
        %v903 = vmax.f32 %v899, 0.0
        %v904 = vmax.f32 %v900, 0.0
        %v905 = vmax.f32 %v901, 0.0
        %906 = vadd.xlane.f32.xlu0 %v902
        %v907 = vpop.xlane.xlu0 %906
        %908 = vadd.xlane.f32.xlu0 %v903
        %v909 = vpop.xlane.xlu0 %908
        %910 = vadd.xlane.f32.xlu0 %v904
        %v911 = vpop.xlane.xlu0 %910
        %912 = vadd.xlane.f32.xlu0 %v905
        %v913 = vpop.xlane.xlu0 %912
        %v914 = vadd.f32 %v907, 0.0
        %v915 = vadd.f32 %v909, 0.0
        %v916 = vadd.f32 %v911, 0.0
        %v917 = vadd.f32 %v913, 0.0
        %918 = vmax.xlane.f32.xlu0 %v902
        %v919 = vpop.xlane.xlu0 %918
        %920 = vmax.xlane.f32.xlu0 %v903
        %v921 = vpop.xlane.xlu0 %920
        %922 = vmax.xlane.f32.xlu0 %v904
        %v923 = vpop.xlane.xlu0 %922
        %924 = vmax.xlane.f32.xlu0 %v905
        %v925 = vpop.xlane.xlu0 %924
        %v926 = vmax.f32 %v919, 0.0
        %v927 = vmax.f32 %v921, 0.0
        %v928 = vmax.f32 %v923, 0.0
        %v929 = vmax.f32 %v925, 0.0
        %v930 = vld [vmem:[#allocation2] sm:$0xff]
        %v931 = vld [vmem:[#allocation2 + $0x8] sm:$0xff]
        %v932 = vld [vmem:[#allocation2 + $0x10] sm:$0xff]
        %v933 = vld [vmem:[#allocation2 + $0x18] sm:$0xff]
        %v934 = vadd.f32 %v930, %v914
        %v935 = vadd.f32 %v931, %v915
        %v936 = vadd.f32 %v932, %v916
        %v937 = vadd.f32 %v933, %v917
        %vm938 = vcmask 56368
        %939 = vst.msk [vmem:[#allocation2] sm:$0xff] %vm938, %v934
        %940 = vst.msk [vmem:[#allocation2 + $0x8] sm:$0xff] %vm938, %v935
        %941 = vst.msk [vmem:[#allocation2 + $0x10] sm:$0xff] %vm938, %v936
        %942 = vst.msk [vmem:[#allocation2 + $0x18] sm:$0xff] %vm938, %v937
        %v943 = vld [vmem:[#allocation3] sm:$0xff]
        %v944 = vld [vmem:[#allocation3 + $0x8] sm:$0xff]
        %v945 = vld [vmem:[#allocation3 + $0x10] sm:$0xff]
        %v946 = vld [vmem:[#allocation3 + $0x18] sm:$0xff]
        %v947 = vmax.f32 %v943, %v926
        %v948 = vmax.f32 %v944, %v927
        %v949 = vmax.f32 %v945, %v928
        %v950 = vmax.f32 %v946, %v929
        %951 = vst.msk [vmem:[#allocation3] sm:$0xff] %vm938, %v947
        %952 = vst.msk [vmem:[#allocation3 + $0x8] sm:$0xff] %vm938, %v948
        %953 = vst.msk [vmem:[#allocation3 + $0x10] sm:$0xff] %vm938, %v949
        %954 = vst.msk [vmem:[#allocation3 + $0x18] sm:$0xff] %vm938, %v950
        %s955 = scalar_lea.vmem %s210, 28 [#allocation4]
        %v956 = vld [vmem:[%s955] sm:$0x7]
        %v957 = vlaneseq
        %v958 = vshrl.u32 %v957, 7
        %v959 = vsub.s32 0, %v958
        %v960 = vrot.slane %v956, %v959
        %v961 = vmul.f32 %v251, %v960
        %v962 = vmul.f32 %v256, %v960
        %v963 = vmul.f32 %v261, %v960
        %v964 = vmul.f32 %v266, %v960
        %v965 = vlaneseq
        %v966 = vshrl.u32 %v965, 7
        %v967 = vsub.s32 1, %v966
        %v968 = vrot.slane %v956, %v967
        %v969 = vmul.f32 %v278, %v968
        %v970 = vmul.f32 %v282, %v968
        %v971 = vmul.f32 %v286, %v968
        %v972 = vmul.f32 %v290, %v968
        %v973 = vadd.f32 %v961, %v969
        %v974 = vadd.f32 %v962, %v970
        %v975 = vadd.f32 %v963, %v971
        %v976 = vadd.f32 %v964, %v972
        %v977 = vlaneseq
        %v978 = vshrl.u32 %v977, 7
        %v979 = vsub.s32 2, %v978
        %v980 = vrot.slane %v956, %v979
        %v981 = vmul.f32 %v306, %v980
        %v982 = vmul.f32 %v310, %v980
        %v983 = vmul.f32 %v314, %v980
        %v984 = vmul.f32 %v318, %v980
        %v985 = vadd.f32 %v973, %v981
        %v986 = vadd.f32 %v974, %v982
        %v987 = vadd.f32 %v975, %v983
        %v988 = vadd.f32 %v976, %v984
        %v989 = vadd.f32 %v985, %v335
        %v990 = vadd.f32 %v986, %v340
        %v991 = vadd.f32 %v987, %v345
        %v992 = vadd.f32 %v988, %v350
        %v993 = vmax.f32 %v989, 0.0
        %v994 = vmax.f32 %v990, 0.0
        %v995 = vmax.f32 %v991, 0.0
        %v996 = vmax.f32 %v992, 0.0
        %997 = vadd.xlane.f32.xlu0 %v993
        %v998 = vpop.xlane.xlu0 %997
        %999 = vadd.xlane.f32.xlu0 %v994
        %v1000 = vpop.xlane.xlu0 %999
        %1001 = vadd.xlane.f32.xlu0 %v995
        %v1002 = vpop.xlane.xlu0 %1001
        %1003 = vadd.xlane.f32.xlu0 %v996
        %v1004 = vpop.xlane.xlu0 %1003
        %v1005 = vadd.f32 %v998, 0.0
        %v1006 = vadd.f32 %v1000, 0.0
        %v1007 = vadd.f32 %v1002, 0.0
        %v1008 = vadd.f32 %v1004, 0.0
        %1009 = vmax.xlane.f32.xlu0 %v993
        %v1010 = vpop.xlane.xlu0 %1009
        %1011 = vmax.xlane.f32.xlu0 %v994
        %v1012 = vpop.xlane.xlu0 %1011
        %1013 = vmax.xlane.f32.xlu0 %v995
        %v1014 = vpop.xlane.xlu0 %1013
        %1015 = vmax.xlane.f32.xlu0 %v996
        %v1016 = vpop.xlane.xlu0 %1015
        %v1017 = vmax.f32 %v1010, 0.0
        %v1018 = vmax.f32 %v1012, 0.0
        %v1019 = vmax.f32 %v1014, 0.0
        %v1020 = vmax.f32 %v1016, 0.0
        %v1021 = vld [vmem:[#allocation2] sm:$0xff]
        %v1022 = vld [vmem:[#allocation2 + $0x8] sm:$0xff]
        %v1023 = vld [vmem:[#allocation2 + $0x10] sm:$0xff]
        %v1024 = vld [vmem:[#allocation2 + $0x18] sm:$0xff]
        %v1025 = vadd.f32 %v1021, %v1005
        %v1026 = vadd.f32 %v1022, %v1006
        %v1027 = vadd.f32 %v1023, %v1007
        %v1028 = vadd.f32 %v1024, %v1008
        %vm1029 = vcmask 64568
        %1030 = vst.msk [vmem:[#allocation2] sm:$0xff] %vm1029, %v1025
        %1031 = vst.msk [vmem:[#allocation2 + $0x8] sm:$0xff] %vm1029, %v1026
        %1032 = vst.msk [vmem:[#allocation2 + $0x10] sm:$0xff] %vm1029, %v1027
        %1033 = vst.msk [vmem:[#allocation2 + $0x18] sm:$0xff] %vm1029, %v1028
        %v1034 = vld [vmem:[#allocation3] sm:$0xff]
        %v1035 = vld [vmem:[#allocation3 + $0x8] sm:$0xff]
        %v1036 = vld [vmem:[#allocation3 + $0x10] sm:$0xff]
        %v1037 = vld [vmem:[#allocation3 + $0x18] sm:$0xff]
        %v1038 = vmax.f32 %v1034, %v1017
        %v1039 = vmax.f32 %v1035, %v1018
        %v1040 = vmax.f32 %v1036, %v1019
        %v1041 = vmax.f32 %v1037, %v1020
        %1042 = vst.msk [vmem:[#allocation3] sm:$0xff] %vm1029, %v1038
        %1043 = vst.msk [vmem:[#allocation3 + $0x8] sm:$0xff] %vm1029, %v1039
        %1044 = vst.msk [vmem:[#allocation3 + $0x10] sm:$0xff] %vm1029, %v1040
        %1045 = vst.msk [vmem:[#allocation3 + $0x18] sm:$0xff] %vm1029, %v1041
        %p1046 = scmp.eq.s32.totalorder %s15, 1
        // Predicated region
        $region78: #{tpu_custom_call.1} parent=68 // pred_check
          %p1047 = pneg %p1046
        $region79: #{tpu_custom_call.1} parent=68 // pred_check_branch
          %1049 = sbr.rel (%p1047) target = $region81
        $region80: #{tpu_custom_call.1} parent=68 // pred_region
          %v1050 = vlaneseq
          %v1051 = vshrl.u32 %v1050, 7
          %v1052 = vadd.s32 %v1051, 8
          %v1053 = vadd.s32 %v1051, 16
          %v1054 = vadd.s32 %v1051, 24
          %v1055 = vlaneseq
          %v1056 = vand.u32 %v1055, 127
          %vm1057 = vcmp.eq.s32.totalorder %v1051, %v1056
          %vm1058 = vcmp.eq.s32.totalorder %v1052, %v1056
          %vm1059 = vcmp.eq.s32.totalorder %v1053, %v1056
          %vm1060 = vcmp.eq.s32.totalorder %v1054, %v1056
          %v1061 = vsel %vm1057, 1, 0
          %v1062 = vsel %vm1058, 1, 0
          %v1063 = vsel %vm1059, 1, 0
          %v1064 = vsel %vm1060, 1, 0
          %v1065 = vcvt.s32.f32 %v1061
          %v1066 = vcvt.s32.f32 %v1062
          %v1067 = vcvt.s32.f32 %v1063
          %v1068 = vcvt.s32.f32 %v1064
          %v1069 = vld [vmem:[#allocation3] sm:$0xff]
          %v1070 = vld [vmem:[#allocation3 + $0x8] sm:$0xff]
          %v1071 = vld [vmem:[#allocation3 + $0x10] sm:$0xff]
          %v1072 = vld [vmem:[#allocation3 + $0x18] sm:$0xff]
          %1074 = vset.pattern.permute.xlu0 0
          %1075 = vperm.xlu0 %1074, %v1069
          %v1076 = vpop.permute.xlu0 %1075
          %1079 = vset.pattern.permute.xlu0 0
          %1080 = vperm.xlu0 %1079, %v1070
          %v1081 = vpop.permute.xlu0 %1080
          %1084 = vset.pattern.permute.xlu0 0
          %1085 = vperm.xlu0 %1084, %v1071
          %v1086 = vpop.permute.xlu0 %1085
          %1089 = vset.pattern.permute.xlu0 0
          %1090 = vperm.xlu0 %1089, %v1072
          %v1091 = vpop.permute.xlu0 %1090
          %v1093 = vmul.f32 %v1076, %v1065
          %v1094 = vmul.f32 %v1081, %v1066
          %v1095 = vmul.f32 %v1086, %v1067
          %v1096 = vmul.f32 %v1091, %v1068
          %vm1097 = vcmask 261120
          %v1098 = vsel %vm1097, %v1093, 0.0
          %v1099 = vsel %vm1097, %v1094, 0.0
          %v1100 = vadd.f32 %v1098, %v1099
          %v1101 = vsel %vm1097, %v1095, 0.0
          %v1102 = vadd.f32 %v1100, %v1101
          %v1103 = vsel %vm1097, %v1096, 0.0
          %v1104 = vadd.f32 %v1102, %v1103
          %v1105 = vrot.slane %v1104, 4
          %v1106 = vadd.f32 %v1104, %v1105
          %v1107 = vrot.slane %v1106, 2
          %v1108 = vadd.f32 %v1106, %v1107
          %v1109 = vrot.slane %v1108, 1
          %v1110 = vadd.f32 %v1108, %v1109
          %v1111 = vld [vmem:[#allocation2] sm:$0xff]
          %v1112 = vld [vmem:[#allocation2 + $0x8] sm:$0xff]
          %v1113 = vld [vmem:[#allocation2 + $0x10] sm:$0xff]
          %v1114 = vld [vmem:[#allocation2 + $0x18] sm:$0xff]
          %1116 = vset.pattern.permute.xlu0 0
          %1117 = vperm.xlu0 %1116, %v1111
          %v1118 = vpop.permute.xlu0 %1117
          %1121 = vset.pattern.permute.xlu0 0
          %1122 = vperm.xlu0 %1121, %v1112
          %v1123 = vpop.permute.xlu0 %1122
          %1126 = vset.pattern.permute.xlu0 0
          %1127 = vperm.xlu0 %1126, %v1113
          %v1128 = vpop.permute.xlu0 %1127
          %1131 = vset.pattern.permute.xlu0 0
          %1132 = vperm.xlu0 %1131, %v1114
          %v1133 = vpop.permute.xlu0 %1132
          %v1135 = vmul.f32 %v1118, %v1065
          %v1136 = vmul.f32 %v1123, %v1066
          %v1137 = vmul.f32 %v1128, %v1067
          %v1138 = vmul.f32 %v1133, %v1068
          %v1139 = vsel %vm1097, %v1135, 0.0
          %v1140 = vsel %vm1097, %v1136, 0.0
          %v1141 = vadd.f32 %v1139, %v1140
          %v1142 = vsel %vm1097, %v1137, 0.0
          %v1143 = vadd.f32 %v1141, %v1142
          %v1144 = vsel %vm1097, %v1138, 0.0
          %v1145 = vadd.f32 %v1143, %v1144
          %v1146 = vrot.slane %v1145, 4
          %v1147 = vadd.f32 %v1145, %v1146
          %v1148 = vrot.slane %v1147, 2
          %v1149 = vadd.f32 %v1147, %v1148
          %v1150 = vrot.slane %v1149, 1
          %v1151 = vadd.f32 %v1149, %v1150
          %v1152 = vmul.f32 %v1151, 0.00390625
          %vm1153 = vcmask 253952
          %1154 = vst.msk [vmem:[#allocation5] sm:$0x1] %vm1153, %v1110
          %1156 = vrot.lane.b32.xlu0 %v1152, 32
          %v1157 = vpop.permute.xlu0 %1156
          %vm1159 = vcmask 516352
          %1160 = vst.msk [vmem:[#allocation5] sm:$0x1] %vm1159, %v1157
          %v1161 = vld [vmem:[#allocation3] sm:$0xff]
          %v1162 = vld [vmem:[#allocation3 + $0x8] sm:$0xff]
          %v1163 = vld [vmem:[#allocation3 + $0x10] sm:$0xff]
          %v1164 = vld [vmem:[#allocation3 + $0x18] sm:$0xff]
          %1166 = vset.pattern.permute.xlu0 1
          %1167 = vperm.xlu0 %1166, %v1161
          %v1168 = vpop.permute.xlu0 %1167
          %1171 = vset.pattern.permute.xlu0 1
          %1172 = vperm.xlu0 %1171, %v1162
          %v1173 = vpop.permute.xlu0 %1172
          %1176 = vset.pattern.permute.xlu0 1
          %1177 = vperm.xlu0 %1176, %v1163
          %v1178 = vpop.permute.xlu0 %1177
          %1181 = vset.pattern.permute.xlu0 1
          %1182 = vperm.xlu0 %1181, %v1164
          %v1183 = vpop.permute.xlu0 %1182
          %v1185 = vmul.f32 %v1168, %v1065
          %v1186 = vmul.f32 %v1173, %v1066
          %v1187 = vmul.f32 %v1178, %v1067
          %v1188 = vmul.f32 %v1183, %v1068
          %v1189 = vsel %vm1097, %v1185, 0.0
          %v1190 = vsel %vm1097, %v1186, 0.0
          %v1191 = vadd.f32 %v1189, %v1190
          %v1192 = vsel %vm1097, %v1187, 0.0
          %v1193 = vadd.f32 %v1191, %v1192
          %v1194 = vsel %vm1097, %v1188, 0.0
          %v1195 = vadd.f32 %v1193, %v1194
          %v1196 = vrot.slane %v1195, 4
          %v1197 = vadd.f32 %v1195, %v1196
          %v1198 = vrot.slane %v1197, 2
          %v1199 = vadd.f32 %v1197, %v1198
          %v1200 = vrot.slane %v1199, 1
          %v1201 = vadd.f32 %v1199, %v1200
          %v1202 = vld [vmem:[#allocation2] sm:$0xff]
          %v1203 = vld [vmem:[#allocation2 + $0x8] sm:$0xff]
          %v1204 = vld [vmem:[#allocation2 + $0x10] sm:$0xff]
          %v1205 = vld [vmem:[#allocation2 + $0x18] sm:$0xff]
          %1207 = vset.pattern.permute.xlu0 1
          %1208 = vperm.xlu0 %1207, %v1202
          %v1209 = vpop.permute.xlu0 %1208
          %1212 = vset.pattern.permute.xlu0 1
          %1213 = vperm.xlu0 %1212, %v1203
          %v1214 = vpop.permute.xlu0 %1213
          %1217 = vset.pattern.permute.xlu0 1
          %1218 = vperm.xlu0 %1217, %v1204
          %v1219 = vpop.permute.xlu0 %1218
          %1222 = vset.pattern.permute.xlu0 1
          %1223 = vperm.xlu0 %1222, %v1205
          %v1224 = vpop.permute.xlu0 %1223
          %v1226 = vmul.f32 %v1209, %v1065
          %v1227 = vmul.f32 %v1214, %v1066
          %v1228 = vmul.f32 %v1219, %v1067
          %v1229 = vmul.f32 %v1224, %v1068
          %v1230 = vsel %vm1097, %v1226, 0.0
          %v1231 = vsel %vm1097, %v1227, 0.0
          %v1232 = vadd.f32 %v1230, %v1231
          %v1233 = vsel %vm1097, %v1228, 0.0
          %v1234 = vadd.f32 %v1232, %v1233
          %v1235 = vsel %vm1097, %v1229, 0.0
          %v1236 = vadd.f32 %v1234, %v1235
          %v1237 = vrot.slane %v1236, 4
          %v1238 = vadd.f32 %v1236, %v1237
          %v1239 = vrot.slane %v1238, 2
          %v1240 = vadd.f32 %v1238, %v1239
          %v1241 = vrot.slane %v1240, 1
          %v1242 = vadd.f32 %v1240, %v1241
          %v1243 = vmul.f32 %v1242, 0.00390625
          %1244 = vst.msk [vmem:[#allocation5 + $0x2] sm:$0x1] %vm1153, %v1201
          %1246 = vrot.lane.b32.xlu0 %v1243, 32
          %v1247 = vpop.permute.xlu0 %1246
          %1249 = vst.msk [vmem:[#allocation5 + $0x2] sm:$0x1] %vm1159, %v1247
          %v1250 = vld [vmem:[#allocation3] sm:$0xff]
          %v1251 = vld [vmem:[#allocation3 + $0x8] sm:$0xff]
          %v1252 = vld [vmem:[#allocation3 + $0x10] sm:$0xff]
          %v1253 = vld [vmem:[#allocation3 + $0x18] sm:$0xff]
          %1255 = vset.pattern.permute.xlu0 2
          %1256 = vperm.xlu0 %1255, %v1250
          %v1257 = vpop.permute.xlu0 %1256
          %1260 = vset.pattern.permute.xlu0 2
          %1261 = vperm.xlu0 %1260, %v1251
          %v1262 = vpop.permute.xlu0 %1261
          %1265 = vset.pattern.permute.xlu0 2
          %1266 = vperm.xlu0 %1265, %v1252
          %v1267 = vpop.permute.xlu0 %1266
          %1270 = vset.pattern.permute.xlu0 2
          %1271 = vperm.xlu0 %1270, %v1253
          %v1272 = vpop.permute.xlu0 %1271
          %v1274 = vmul.f32 %v1257, %v1065
          %v1275 = vmul.f32 %v1262, %v1066
          %v1276 = vmul.f32 %v1267, %v1067
          %v1277 = vmul.f32 %v1272, %v1068
          %v1278 = vsel %vm1097, %v1274, 0.0
          %v1279 = vsel %vm1097, %v1275, 0.0
          %v1280 = vadd.f32 %v1278, %v1279
          %v1281 = vsel %vm1097, %v1276, 0.0
          %v1282 = vadd.f32 %v1280, %v1281
          %v1283 = vsel %vm1097, %v1277, 0.0
          %v1284 = vadd.f32 %v1282, %v1283
          %v1285 = vrot.slane %v1284, 4
          %v1286 = vadd.f32 %v1284, %v1285
          %v1287 = vrot.slane %v1286, 2
          %v1288 = vadd.f32 %v1286, %v1287
          %v1289 = vrot.slane %v1288, 1
          %v1290 = vadd.f32 %v1288, %v1289
          %v1291 = vld [vmem:[#allocation2] sm:$0xff]
          %v1292 = vld [vmem:[#allocation2 + $0x8] sm:$0xff]
          %v1293 = vld [vmem:[#allocation2 + $0x10] sm:$0xff]
          %v1294 = vld [vmem:[#allocation2 + $0x18] sm:$0xff]
          %1296 = vset.pattern.permute.xlu0 2
          %1297 = vperm.xlu0 %1296, %v1291
          %v1298 = vpop.permute.xlu0 %1297
          %1301 = vset.pattern.permute.xlu0 2
          %1302 = vperm.xlu0 %1301, %v1292
          %v1303 = vpop.permute.xlu0 %1302
          %1306 = vset.pattern.permute.xlu0 2
          %1307 = vperm.xlu0 %1306, %v1293
          %v1308 = vpop.permute.xlu0 %1307
          %1311 = vset.pattern.permute.xlu0 2
          %1312 = vperm.xlu0 %1311, %v1294
          %v1313 = vpop.permute.xlu0 %1312
          %v1315 = vmul.f32 %v1298, %v1065
          %v1316 = vmul.f32 %v1303, %v1066
          %v1317 = vmul.f32 %v1308, %v1067
          %v1318 = vmul.f32 %v1313, %v1068
          %v1319 = vsel %vm1097, %v1315, 0.0
          %v1320 = vsel %vm1097, %v1316, 0.0
          %v1321 = vadd.f32 %v1319, %v1320
          %v1322 = vsel %vm1097, %v1317, 0.0
          %v1323 = vadd.f32 %v1321, %v1322
          %v1324 = vsel %vm1097, %v1318, 0.0
          %v1325 = vadd.f32 %v1323, %v1324
          %v1326 = vrot.slane %v1325, 4
          %v1327 = vadd.f32 %v1325, %v1326
          %v1328 = vrot.slane %v1327, 2
          %v1329 = vadd.f32 %v1327, %v1328
          %v1330 = vrot.slane %v1329, 1
          %v1331 = vadd.f32 %v1329, %v1330
          %v1332 = vmul.f32 %v1331, 0.00390625
          %1333 = vst.msk [vmem:[#allocation5 + $0x4] sm:$0x1] %vm1153, %v1290
          %1335 = vrot.lane.b32.xlu0 %v1332, 32
          %v1336 = vpop.permute.xlu0 %1335
          %1338 = vst.msk [vmem:[#allocation5 + $0x4] sm:$0x1] %vm1159, %v1336
          %v1339 = vld [vmem:[#allocation3] sm:$0xff]
          %v1340 = vld [vmem:[#allocation3 + $0x8] sm:$0xff]
          %v1341 = vld [vmem:[#allocation3 + $0x10] sm:$0xff]
          %v1342 = vld [vmem:[#allocation3 + $0x18] sm:$0xff]
          %1344 = vset.pattern.permute.xlu0 3
          %1345 = vperm.xlu0 %1344, %v1339
          %v1346 = vpop.permute.xlu0 %1345
          %1349 = vset.pattern.permute.xlu0 3
          %1350 = vperm.xlu0 %1349, %v1340
          %v1351 = vpop.permute.xlu0 %1350
          %1354 = vset.pattern.permute.xlu0 3
          %1355 = vperm.xlu0 %1354, %v1341
          %v1356 = vpop.permute.xlu0 %1355
          %1359 = vset.pattern.permute.xlu0 3
          %1360 = vperm.xlu0 %1359, %v1342
          %v1361 = vpop.permute.xlu0 %1360
          %v1363 = vmul.f32 %v1346, %v1065
          %v1364 = vmul.f32 %v1351, %v1066
          %v1365 = vmul.f32 %v1356, %v1067
          %v1366 = vmul.f32 %v1361, %v1068
          %v1367 = vsel %vm1097, %v1363, 0.0
          %v1368 = vsel %vm1097, %v1364, 0.0
          %v1369 = vadd.f32 %v1367, %v1368
          %v1370 = vsel %vm1097, %v1365, 0.0
          %v1371 = vadd.f32 %v1369, %v1370
          %v1372 = vsel %vm1097, %v1366, 0.0
          %v1373 = vadd.f32 %v1371, %v1372
          %v1374 = vrot.slane %v1373, 4
          %v1375 = vadd.f32 %v1373, %v1374
          %v1376 = vrot.slane %v1375, 2
          %v1377 = vadd.f32 %v1375, %v1376
          %v1378 = vrot.slane %v1377, 1
          %v1379 = vadd.f32 %v1377, %v1378
          %v1380 = vld [vmem:[#allocation2] sm:$0xff]
          %v1381 = vld [vmem:[#allocation2 + $0x8] sm:$0xff]
          %v1382 = vld [vmem:[#allocation2 + $0x10] sm:$0xff]
          %v1383 = vld [vmem:[#allocation2 + $0x18] sm:$0xff]
          %1385 = vset.pattern.permute.xlu0 3
          %1386 = vperm.xlu0 %1385, %v1380
          %v1387 = vpop.permute.xlu0 %1386
          %1390 = vset.pattern.permute.xlu0 3
          %1391 = vperm.xlu0 %1390, %v1381
          %v1392 = vpop.permute.xlu0 %1391
          %1395 = vset.pattern.permute.xlu0 3
          %1396 = vperm.xlu0 %1395, %v1382
          %v1397 = vpop.permute.xlu0 %1396
          %1400 = vset.pattern.permute.xlu0 3
          %1401 = vperm.xlu0 %1400, %v1383
          %v1402 = vpop.permute.xlu0 %1401
          %v1404 = vmul.f32 %v1387, %v1065
          %v1405 = vmul.f32 %v1392, %v1066
          %v1406 = vmul.f32 %v1397, %v1067
          %v1407 = vmul.f32 %v1402, %v1068
          %v1408 = vsel %vm1097, %v1404, 0.0
          %v1409 = vsel %vm1097, %v1405, 0.0
          %v1410 = vadd.f32 %v1408, %v1409
          %v1411 = vsel %vm1097, %v1406, 0.0
          %v1412 = vadd.f32 %v1410, %v1411
          %v1413 = vsel %vm1097, %v1407, 0.0
          %v1414 = vadd.f32 %v1412, %v1413
          %v1415 = vrot.slane %v1414, 4
          %v1416 = vadd.f32 %v1414, %v1415
          %v1417 = vrot.slane %v1416, 2
          %v1418 = vadd.f32 %v1416, %v1417
          %v1419 = vrot.slane %v1418, 1
          %v1420 = vadd.f32 %v1418, %v1419
          %v1421 = vmul.f32 %v1420, 0.00390625
          %1422 = vst.msk [vmem:[#allocation5 + $0x6] sm:$0x1] %vm1153, %v1379
          %1424 = vrot.lane.b32.xlu0 %v1421, 32
          %v1425 = vpop.permute.xlu0 %1424
          %1427 = vst.msk [vmem:[#allocation5 + $0x6] sm:$0x1] %vm1159, %v1425
          %v1428 = vld [vmem:[#allocation3] sm:$0xff]
          %v1429 = vld [vmem:[#allocation3 + $0x8] sm:$0xff]
          %v1430 = vld [vmem:[#allocation3 + $0x10] sm:$0xff]
          %v1431 = vld [vmem:[#allocation3 + $0x18] sm:$0xff]
          %1433 = vset.pattern.permute.xlu0 4
          %1434 = vperm.xlu0 %1433, %v1428
          %v1435 = vpop.permute.xlu0 %1434
          %1438 = vset.pattern.permute.xlu0 4
          %1439 = vperm.xlu0 %1438, %v1429
          %v1440 = vpop.permute.xlu0 %1439
          %1443 = vset.pattern.permute.xlu0 4
          %1444 = vperm.xlu0 %1443, %v1430
          %v1445 = vpop.permute.xlu0 %1444
          %1448 = vset.pattern.permute.xlu0 4
          %1449 = vperm.xlu0 %1448, %v1431
          %v1450 = vpop.permute.xlu0 %1449
          %v1452 = vmul.f32 %v1435, %v1065
          %v1453 = vmul.f32 %v1440, %v1066
          %v1454 = vmul.f32 %v1445, %v1067
          %v1455 = vmul.f32 %v1450, %v1068
          %v1456 = vsel %vm1097, %v1452, 0.0
          %v1457 = vsel %vm1097, %v1453, 0.0
          %v1458 = vadd.f32 %v1456, %v1457
          %v1459 = vsel %vm1097, %v1454, 0.0
          %v1460 = vadd.f32 %v1458, %v1459
          %v1461 = vsel %vm1097, %v1455, 0.0
          %v1462 = vadd.f32 %v1460, %v1461
          %v1463 = vrot.slane %v1462, 4
          %v1464 = vadd.f32 %v1462, %v1463
          %v1465 = vrot.slane %v1464, 2
          %v1466 = vadd.f32 %v1464, %v1465
          %v1467 = vrot.slane %v1466, 1
          %v1468 = vadd.f32 %v1466, %v1467
          %v1469 = vld [vmem:[#allocation2] sm:$0xff]
          %v1470 = vld [vmem:[#allocation2 + $0x8] sm:$0xff]
          %v1471 = vld [vmem:[#allocation2 + $0x10] sm:$0xff]
          %v1472 = vld [vmem:[#allocation2 + $0x18] sm:$0xff]
          %1474 = vset.pattern.permute.xlu0 4
          %1475 = vperm.xlu0 %1474, %v1469
          %v1476 = vpop.permute.xlu0 %1475
          %1479 = vset.pattern.permute.xlu0 4
          %1480 = vperm.xlu0 %1479, %v1470
          %v1481 = vpop.permute.xlu0 %1480
          %1484 = vset.pattern.permute.xlu0 4
          %1485 = vperm.xlu0 %1484, %v1471
          %v1486 = vpop.permute.xlu0 %1485
          %1489 = vset.pattern.permute.xlu0 4
          %1490 = vperm.xlu0 %1489, %v1472
          %v1491 = vpop.permute.xlu0 %1490
          %v1493 = vmul.f32 %v1476, %v1065
          %v1494 = vmul.f32 %v1481, %v1066
          %v1495 = vmul.f32 %v1486, %v1067
          %v1496 = vmul.f32 %v1491, %v1068
          %v1497 = vsel %vm1097, %v1493, 0.0
          %v1498 = vsel %vm1097, %v1494, 0.0
          %v1499 = vadd.f32 %v1497, %v1498
          %v1500 = vsel %vm1097, %v1495, 0.0
          %v1501 = vadd.f32 %v1499, %v1500
          %v1502 = vsel %vm1097, %v1496, 0.0
          %v1503 = vadd.f32 %v1501, %v1502
          %v1504 = vrot.slane %v1503, 4
          %v1505 = vadd.f32 %v1503, %v1504
          %v1506 = vrot.slane %v1505, 2
          %v1507 = vadd.f32 %v1505, %v1506
          %v1508 = vrot.slane %v1507, 1
          %v1509 = vadd.f32 %v1507, %v1508
          %v1510 = vmul.f32 %v1509, 0.00390625
          %1511 = vst.msk [vmem:[#allocation5 + $0x1] sm:$0x1] %vm1153, %v1468
          %1513 = vrot.lane.b32.xlu0 %v1510, 32
          %v1514 = vpop.permute.xlu0 %1513
          %1516 = vst.msk [vmem:[#allocation5 + $0x1] sm:$0x1] %vm1159, %v1514
          %v1517 = vld [vmem:[#allocation3] sm:$0xff]
          %v1518 = vld [vmem:[#allocation3 + $0x8] sm:$0xff]
          %v1519 = vld [vmem:[#allocation3 + $0x10] sm:$0xff]
          %v1520 = vld [vmem:[#allocation3 + $0x18] sm:$0xff]
          %1522 = vset.pattern.permute.xlu0 5
          %1523 = vperm.xlu0 %1522, %v1517
          %v1524 = vpop.permute.xlu0 %1523
          %1527 = vset.pattern.permute.xlu0 5
          %1528 = vperm.xlu0 %1527, %v1518
          %v1529 = vpop.permute.xlu0 %1528
          %1532 = vset.pattern.permute.xlu0 5
          %1533 = vperm.xlu0 %1532, %v1519
          %v1534 = vpop.permute.xlu0 %1533
          %1537 = vset.pattern.permute.xlu0 5
          %1538 = vperm.xlu0 %1537, %v1520
          %v1539 = vpop.permute.xlu0 %1538
          %v1541 = vmul.f32 %v1524, %v1065
          %v1542 = vmul.f32 %v1529, %v1066
          %v1543 = vmul.f32 %v1534, %v1067
          %v1544 = vmul.f32 %v1539, %v1068
          %v1545 = vsel %vm1097, %v1541, 0.0
          %v1546 = vsel %vm1097, %v1542, 0.0
          %v1547 = vadd.f32 %v1545, %v1546
          %v1548 = vsel %vm1097, %v1543, 0.0
          %v1549 = vadd.f32 %v1547, %v1548
          %v1550 = vsel %vm1097, %v1544, 0.0
          %v1551 = vadd.f32 %v1549, %v1550
          %v1552 = vrot.slane %v1551, 4
          %v1553 = vadd.f32 %v1551, %v1552
          %v1554 = vrot.slane %v1553, 2
          %v1555 = vadd.f32 %v1553, %v1554
          %v1556 = vrot.slane %v1555, 1
          %v1557 = vadd.f32 %v1555, %v1556
          %v1558 = vld [vmem:[#allocation2] sm:$0xff]
          %v1559 = vld [vmem:[#allocation2 + $0x8] sm:$0xff]
          %v1560 = vld [vmem:[#allocation2 + $0x10] sm:$0xff]
          %v1561 = vld [vmem:[#allocation2 + $0x18] sm:$0xff]
          %1563 = vset.pattern.permute.xlu0 5
          %1564 = vperm.xlu0 %1563, %v1558
          %v1565 = vpop.permute.xlu0 %1564
          %1568 = vset.pattern.permute.xlu0 5
          %1569 = vperm.xlu0 %1568, %v1559
          %v1570 = vpop.permute.xlu0 %1569
          %1573 = vset.pattern.permute.xlu0 5
          %1574 = vperm.xlu0 %1573, %v1560
          %v1575 = vpop.permute.xlu0 %1574
          %1578 = vset.pattern.permute.xlu0 5
          %1579 = vperm.xlu0 %1578, %v1561
          %v1580 = vpop.permute.xlu0 %1579
          %v1582 = vmul.f32 %v1565, %v1065
          %v1583 = vmul.f32 %v1570, %v1066
          %v1584 = vmul.f32 %v1575, %v1067
          %v1585 = vmul.f32 %v1580, %v1068
          %v1586 = vsel %vm1097, %v1582, 0.0
          %v1587 = vsel %vm1097, %v1583, 0.0
          %v1588 = vadd.f32 %v1586, %v1587
          %v1589 = vsel %vm1097, %v1584, 0.0
          %v1590 = vadd.f32 %v1588, %v1589
          %v1591 = vsel %vm1097, %v1585, 0.0
          %v1592 = vadd.f32 %v1590, %v1591
          %v1593 = vrot.slane %v1592, 4
          %v1594 = vadd.f32 %v1592, %v1593
          %v1595 = vrot.slane %v1594, 2
          %v1596 = vadd.f32 %v1594, %v1595
          %v1597 = vrot.slane %v1596, 1
          %v1598 = vadd.f32 %v1596, %v1597
          %v1599 = vmul.f32 %v1598, 0.00390625
          %1600 = vst.msk [vmem:[#allocation5 + $0x3] sm:$0x1] %vm1153, %v1557
          %1602 = vrot.lane.b32.xlu0 %v1599, 32
          %v1603 = vpop.permute.xlu0 %1602
          %1605 = vst.msk [vmem:[#allocation5 + $0x3] sm:$0x1] %vm1159, %v1603
          %v1606 = vld [vmem:[#allocation3] sm:$0xff]
          %v1607 = vld [vmem:[#allocation3 + $0x8] sm:$0xff]
          %v1608 = vld [vmem:[#allocation3 + $0x10] sm:$0xff]
          %v1609 = vld [vmem:[#allocation3 + $0x18] sm:$0xff]
          %1611 = vset.pattern.permute.xlu0 6
          %1612 = vperm.xlu0 %1611, %v1606
          %v1613 = vpop.permute.xlu0 %1612
          %1616 = vset.pattern.permute.xlu0 6
          %1617 = vperm.xlu0 %1616, %v1607
          %v1618 = vpop.permute.xlu0 %1617
          %1621 = vset.pattern.permute.xlu0 6
          %1622 = vperm.xlu0 %1621, %v1608
          %v1623 = vpop.permute.xlu0 %1622
          %1626 = vset.pattern.permute.xlu0 6
          %1627 = vperm.xlu0 %1626, %v1609
          %v1628 = vpop.permute.xlu0 %1627
          %v1630 = vmul.f32 %v1613, %v1065
          %v1631 = vmul.f32 %v1618, %v1066
          %v1632 = vmul.f32 %v1623, %v1067
          %v1633 = vmul.f32 %v1628, %v1068
          %v1634 = vsel %vm1097, %v1630, 0.0
          %v1635 = vsel %vm1097, %v1631, 0.0
          %v1636 = vadd.f32 %v1634, %v1635
          %v1637 = vsel %vm1097, %v1632, 0.0
          %v1638 = vadd.f32 %v1636, %v1637
          %v1639 = vsel %vm1097, %v1633, 0.0
          %v1640 = vadd.f32 %v1638, %v1639
          %v1641 = vrot.slane %v1640, 4
          %v1642 = vadd.f32 %v1640, %v1641
          %v1643 = vrot.slane %v1642, 2
          %v1644 = vadd.f32 %v1642, %v1643
          %v1645 = vrot.slane %v1644, 1
          %v1646 = vadd.f32 %v1644, %v1645
          %v1647 = vld [vmem:[#allocation2] sm:$0xff]
          %v1648 = vld [vmem:[#allocation2 + $0x8] sm:$0xff]
          %v1649 = vld [vmem:[#allocation2 + $0x10] sm:$0xff]
          %v1650 = vld [vmem:[#allocation2 + $0x18] sm:$0xff]
          %1652 = vset.pattern.permute.xlu0 6
          %1653 = vperm.xlu0 %1652, %v1647
          %v1654 = vpop.permute.xlu0 %1653
          %1657 = vset.pattern.permute.xlu0 6
          %1658 = vperm.xlu0 %1657, %v1648
          %v1659 = vpop.permute.xlu0 %1658
          %1662 = vset.pattern.permute.xlu0 6
          %1663 = vperm.xlu0 %1662, %v1649
          %v1664 = vpop.permute.xlu0 %1663
          %1667 = vset.pattern.permute.xlu0 6
          %1668 = vperm.xlu0 %1667, %v1650
          %v1669 = vpop.permute.xlu0 %1668
          %v1671 = vmul.f32 %v1654, %v1065
          %v1672 = vmul.f32 %v1659, %v1066
          %v1673 = vmul.f32 %v1664, %v1067
          %v1674 = vmul.f32 %v1669, %v1068
          %v1675 = vsel %vm1097, %v1671, 0.0
          %v1676 = vsel %vm1097, %v1672, 0.0
          %v1677 = vadd.f32 %v1675, %v1676
          %v1678 = vsel %vm1097, %v1673, 0.0
          %v1679 = vadd.f32 %v1677, %v1678
          %v1680 = vsel %vm1097, %v1674, 0.0
          %v1681 = vadd.f32 %v1679, %v1680
          %v1682 = vrot.slane %v1681, 4
          %v1683 = vadd.f32 %v1681, %v1682
          %v1684 = vrot.slane %v1683, 2
          %v1685 = vadd.f32 %v1683, %v1684
          %v1686 = vrot.slane %v1685, 1
          %v1687 = vadd.f32 %v1685, %v1686
          %v1688 = vmul.f32 %v1687, 0.00390625
          %1689 = vst.msk [vmem:[#allocation5 + $0x5] sm:$0x1] %vm1153, %v1646
          %1691 = vrot.lane.b32.xlu0 %v1688, 32
          %v1692 = vpop.permute.xlu0 %1691
          %1694 = vst.msk [vmem:[#allocation5 + $0x5] sm:$0x1] %vm1159, %v1692
          %v1695 = vld [vmem:[#allocation3] sm:$0xff]
          %v1696 = vld [vmem:[#allocation3 + $0x8] sm:$0xff]
          %v1697 = vld [vmem:[#allocation3 + $0x10] sm:$0xff]
          %v1698 = vld [vmem:[#allocation3 + $0x18] sm:$0xff]
          %1700 = vset.pattern.permute.xlu0 7
          %1701 = vperm.xlu0 %1700, %v1695
          %v1702 = vpop.permute.xlu0 %1701
          %1705 = vset.pattern.permute.xlu0 7
          %1706 = vperm.xlu0 %1705, %v1696
          %v1707 = vpop.permute.xlu0 %1706
          %1710 = vset.pattern.permute.xlu0 7
          %1711 = vperm.xlu0 %1710, %v1697
          %v1712 = vpop.permute.xlu0 %1711
          %1715 = vset.pattern.permute.xlu0 7
          %1716 = vperm.xlu0 %1715, %v1698
          %v1717 = vpop.permute.xlu0 %1716
          %v1719 = vmul.f32 %v1702, %v1065
          %v1720 = vmul.f32 %v1707, %v1066
          %v1721 = vmul.f32 %v1712, %v1067
          %v1722 = vmul.f32 %v1717, %v1068
          %v1723 = vsel %vm1097, %v1719, 0.0
          %v1724 = vsel %vm1097, %v1720, 0.0
          %v1725 = vadd.f32 %v1723, %v1724
          %v1726 = vsel %vm1097, %v1721, 0.0
          %v1727 = vadd.f32 %v1725, %v1726
          %v1728 = vsel %vm1097, %v1722, 0.0
          %v1729 = vadd.f32 %v1727, %v1728
          %v1730 = vrot.slane %v1729, 4
          %v1731 = vadd.f32 %v1729, %v1730
          %v1732 = vrot.slane %v1731, 2
          %v1733 = vadd.f32 %v1731, %v1732
          %v1734 = vrot.slane %v1733, 1
          %v1735 = vadd.f32 %v1733, %v1734
          %v1736 = vld [vmem:[#allocation2] sm:$0xff]
          %v1737 = vld [vmem:[#allocation2 + $0x8] sm:$0xff]
          %v1738 = vld [vmem:[#allocation2 + $0x10] sm:$0xff]
          %v1739 = vld [vmem:[#allocation2 + $0x18] sm:$0xff]
          %1741 = vset.pattern.permute.xlu0 7
          %1742 = vperm.xlu0 %1741, %v1736
          %v1743 = vpop.permute.xlu0 %1742
          %1746 = vset.pattern.permute.xlu0 7
          %1747 = vperm.xlu0 %1746, %v1737
          %v1748 = vpop.permute.xlu0 %1747
          %1751 = vset.pattern.permute.xlu0 7
          %1752 = vperm.xlu0 %1751, %v1738
          %v1753 = vpop.permute.xlu0 %1752
          %1756 = vset.pattern.permute.xlu0 7
          %1757 = vperm.xlu0 %1756, %v1739
          %v1758 = vpop.permute.xlu0 %1757
          %v1760 = vmul.f32 %v1743, %v1065
          %v1761 = vmul.f32 %v1748, %v1066
          %v1762 = vmul.f32 %v1753, %v1067
          %v1763 = vmul.f32 %v1758, %v1068
          %v1764 = vsel %vm1097, %v1760, 0.0
          %v1765 = vsel %vm1097, %v1761, 0.0
          %v1766 = vadd.f32 %v1764, %v1765
          %v1767 = vsel %vm1097, %v1762, 0.0
          %v1768 = vadd.f32 %v1766, %v1767
          %v1769 = vsel %vm1097, %v1763, 0.0
          %v1770 = vadd.f32 %v1768, %v1769
          %v1771 = vrot.slane %v1770, 4
          %v1772 = vadd.f32 %v1770, %v1771
          %v1773 = vrot.slane %v1772, 2
          %v1774 = vadd.f32 %v1772, %v1773
          %v1775 = vrot.slane %v1774, 1
          %v1776 = vadd.f32 %v1774, %v1775
          %v1777 = vmul.f32 %v1776, 0.00390625
          %1778 = vst.msk [vmem:[#allocation5 + $0x7] sm:$0x1] %vm1153, %v1735
          %1780 = vrot.lane.b32.xlu0 %v1777, 32
          %v1781 = vpop.permute.xlu0 %1780
          %1783 = vst.msk [vmem:[#allocation5 + $0x7] sm:$0x1] %vm1159, %v1781
        $region81: #{tpu_custom_call.1} parent=68 // pred_fallthru
          _
        // Predicated region
        $region82: #{tpu_custom_call.1} parent=68 // pred_check
          %p1784 = pneg %p96
        $region83: #{tpu_custom_call.1} parent=68 // pred_check_branch
          %1786 = sbr.rel (%p1784) target = $region85
        $region84: #{tpu_custom_call.1} parent=68 // pred_region
          %s1788 = ssub.s32 128, 128
          %1789 = vsyncadd [#allocation6], %s1788
          %s1791 = sshll.u32 [#allocation5], 4
          %s1792 = int_to_ptr.vmem [resolvable:$true] %s1791
          %1794 = dma.vmem_to_hbm [thread:$0]  %s1792, 128, %s3, [#allocation6]
        $region85: #{tpu_custom_call.1} parent=68 // pred_fallthru
          _
        // Predicated region
        $region86: #{tpu_custom_call.1} parent=68 // pred_check
          %p1795 = pneg %p96
        $region87: #{tpu_custom_call.1} parent=68 // pred_check_branch
          %1797 = sbr.rel (%p1795) target = $region89
        $region88: #{tpu_custom_call.1} parent=68 // pred_region
          %1798 = dma.done [#allocation6], 128
        $region89: #{tpu_custom_call.1} parent=68 // pred_fallthru
          _
      $region69: #{tpu_custom_call.1} parent=5 // pred_fallthru
        _
      %p1799 = scmp.le.s32.totalorder 2, %s10
      // Predicated region
      $region90: #{tpu_custom_call.1} parent=5 // pred_check
        %p1800 = pneg %p1799
      $region91: #{tpu_custom_call.1} parent=5 // pred_check_branch
        %1802 = sbr.rel (%p1800) target = $region93
      $region92: #{tpu_custom_call.1} parent=5 // pred_region
        %s1803 = ssub.s32 %s10, 2
      $region93: #{tpu_custom_call.1} parent=5 // pred_fallthru
        _
    $region6: #{tpu_custom_call.1} parent=1 // loop_footer
      %s14 = sadd.s32 1, %s10
    $region7: #{tpu_custom_call.1} parent=1 // loop_footer_branch
      %9 = sbr.rel target = $region3
    $region8: #{tpu_custom_call.1} parent=1 // loop_exit
      _
    %1804 = vsyncpa [#allocation6], 1
    %s1805 = scalar_lea.sflag [#allocation6], 1
    %1806 = vsyncpa %s1805, 1

</llo_original>
